<compile_context>
chip_gen: v7x
topology: tpu7x:2x2x1
jax: 0.10.0
libtpu: 0.0.40
codegen_flags: <defaults>
</compile_context>

<pallas_src>
import math
import functools

import jax
import jax.numpy as jnp
from jax import lax
from jax.experimental import pallas as pl
from jax.experimental.pallas import tpu as pltpu

_MIB = 1024 * 1024


def _layernorm(x, gamma, beta, eps=1e-5):
    mu = jnp.mean(x, axis=-1, keepdims=True)
    var = jnp.mean((x - mu) ** 2, axis=-1, keepdims=True)
    return (x - mu) * lax.rsqrt(var + eps) * gamma + beta


def _gelu_exact(x):
    # Exact-erf GELU (PyTorch nn.GELU default) via Abramowitz–Stegun 7.1.26;
    # uses only exp / mul / select so it always lowers on the VPU/EUP.
    z = x * (1.0 / math.sqrt(2.0))
    a = jnp.abs(z)
    t = 1.0 / (1.0 + 0.3275911 * a)
    poly = t * (0.254829592 + t * (-0.284496736 + t * (1.421413741 +
           t * (-1.453152027 + t * 1.061405429))))
    erf_abs = 1.0 - poly * jnp.exp(-a * a)
    erf_z = jnp.where(z >= 0.0, erf_abs, -erf_abs)
    return 0.5 * x * (1.0 + erf_z)


def _vmem_limit_bytes():
    # v5e/v6e: 128 MiB VMEM/TC -> ~112 MiB budget; v7x: 64 MiB -> ~48 MiB.
    try:
        cap = int(pltpu.get_tpu_info().vmem_capacity_bytes)
    except Exception:
        cap = 64 * _MIB          # conservative (v7x) fallback
    return int(min(max(cap - 16 * _MIB, 32 * _MIB), 112 * _MIB))


def _const_spec(shape):
    # Grid-invariant block (weights / LN params): constant index map + single
    # buffering so it is DMA'd once and not double-buffered in VMEM.
    n = len(shape)
    return pl.BlockSpec(shape, lambda *_: (0,) * n,
                        pipeline_mode=pl.Buffered(1))


# ---------------------------------------------------------------------------
# Kernel 1: per-batch  y = x + MHA(norm1(x), x, x)
# ---------------------------------------------------------------------------
def attn_block_kernel(num_heads,
                      x_ref, g1_ref, be1_ref,
                      wq_ref, wkv_ref, bq_ref, bkv_ref,
                      wo_ref, bo_ref,
                      y_ref, heads_ref):
    x = x_ref[0]                                   # (S, D) f32
    S, D = x.shape
    dh = D // num_heads
    scale = 1.0 / math.sqrt(dh)

    # PyTorch reference: attn(norm1(x), x, x) -> only the query is normed.
    xn = _layernorm(x, g1_ref[...], be1_ref[...])

    # Full-width fused projections (K=D contraction, N=D / N=2D output).
    q_all = jnp.dot(xn.astype(jnp.bfloat16), wq_ref[...],
                    preferred_element_type=jnp.float32) + bq_ref[...]
    kv_all = jnp.dot(x.astype(jnp.bfloat16), wkv_ref[...],
                     preferred_element_type=jnp.float32) + bkv_ref[...]
    qb = q_all.astype(jnp.bfloat16)                # single casts (not per head)
    kvb = kv_all.astype(jnp.bfloat16)

    tb = (((1,), (1,)), ((), ()))                  # contract last dims (a @ b.T)
    for h in range(num_heads):                     # per-head: only O(S^2) part
        q = qb[:, h * dh:(h + 1) * dh]
        k = kvb[:, h * dh:(h + 1) * dh]
        v = kvb[:, D + h * dh:D + (h + 1) * dh]

        s = lax.dot_general(q, k, tb, preferred_element_type=jnp.float32) * scale
        s = s - jnp.max(s, axis=-1, keepdims=True)         # softmax stats in f32
        p = jnp.exp(s)
        p = p * pl.reciprocal(jnp.sum(p, axis=-1, keepdims=True), approx=True)

        o = jnp.dot(p.astype(jnp.bfloat16), v,
                    preferred_element_type=jnp.float32)     # (S, dh)
        heads_ref[:, h * dh:(h + 1) * dh] = o               # static lane offsets

    # One full-width out-projection: (S,D) x (D,D).
    attn = jnp.dot(heads_ref[...].astype(jnp.bfloat16), wo_ref[...],
                   preferred_element_type=jnp.float32)
    y_ref[0] = x + attn + bo_ref[...]


# ---------------------------------------------------------------------------
# Kernel 2: per-token-tile  out = t + gate_prob * Expert_top1(norm2(t))
# ---------------------------------------------------------------------------
def moe_block_kernel(num_experts,
                     t_ref, g2_ref, be2_ref,
                     wg_ref, bg_ref,
                     w1_ref, b1_ref, w2_ref, b2_ref,
                     o_ref):
    t = t_ref[...]                                 # (TN, D) f32
    tn = _layernorm(t, g2_ref[...], be2_ref[...])

    # Gate in f32; weights are lane-padded to >=128 outputs in the wrapper so
    # this is a full-width MXU pass.  Padded lanes carry a -1e30 bias.
    logits = jnp.dot(tn, wg_ref[...],
                     preferred_element_type=jnp.float32) + bg_ref[...]
    m = jnp.max(logits, axis=-1, keepdims=True)
    denom = jnp.sum(jnp.exp(logits - m), axis=-1, keepdims=True)
    gate_val = 1.0 / denom                         # exact top-1 softmax prob
    iota = lax.broadcasted_iota(jnp.int32, logits.shape, 1)
    sel = jnp.min(jnp.where(logits >= m, iota, logits.shape[-1]),
                  axis=-1, keepdims=True)          # (TN, 1) selected expert id

    tnb = tn.astype(jnp.bfloat16)
    tb = (((1,), (1,)), ((), ()))                  # contract on weights' last dim
    acc = jnp.zeros_like(t)
    for e in range(num_experts):                   # dense-masked top-1 (small E)
        h = lax.dot_general(tnb, w1_ref[e], tb,
                            preferred_element_type=jnp.float32) + b1_ref[e]
        h = _gelu_exact(h)
        oe = lax.dot_general(h.astype(jnp.bfloat16), w2_ref[e], tb,
                             preferred_element_type=jnp.float32) + b2_ref[e]
        acc = acc + jnp.where(sel == e, oe, 0.0)

    o_ref[...] = t + gate_val * acc


# ---------------------------------------------------------------------------
# Wrapper
# ---------------------------------------------------------------------------
def moe_vit_block(x, p, *, num_heads, num_experts):
    S, B, D = x.shape
    assert D % num_heads == 0, "dim must be divisible by num_heads"
    f32, bf16 = jnp.float32, jnp.bfloat16
    nh, E = num_heads, num_experts
    vmem_limit = _vmem_limit_bytes()

    # Attention weights, pre-transposed once so kernels do (S,D)x(D,*) matmuls.
    wq_t = p["in_proj_w"][:D].T.astype(bf16)            # (D, D)
    wkv_t = p["in_proj_w"][D:].T.astype(bf16)           # (D, 2D)  [K | V]
    bq = p["in_proj_b"][:D].reshape(1, D).astype(f32)
    bkv = p["in_proj_b"][D:].reshape(1, 2 * D).astype(f32)
    wo_t = p["out_proj_w"].T.astype(bf16)                # (D, D)
    bo = p["out_proj_b"].reshape(1, D).astype(f32)

    xb = jnp.transpose(x, (1, 0, 2)).astype(f32)         # (B, S, D)

    # Grid over batch (>=2 keeps both v7x TensorCores busy for B>=2).
    y = pl.pallas_call(
        functools.partial(attn_block_kernel, nh),
        grid=(B,),
        in_specs=[
            pl.BlockSpec((1, S, D), lambda b: (b, 0, 0)),   # streamed activations
            _const_spec((1, D)), _const_spec((1, D)),       # LN params
            _const_spec((D, D)), _const_spec((D, 2 * D)),   # Wq^T, Wkv^T
            _const_spec((1, D)), _const_spec((1, 2 * D)),   # bq, bkv
            _const_spec((D, D)), _const_spec((1, D)),       # Wo^T, bo
        ],
        out_specs=pl.BlockSpec((1, S, D), lambda b: (b, 0, 0)),
        out_shape=jax.ShapeDtypeStruct((B, S, D), f32),
        scratch_shapes=[pltpu.VMEM((S, D), f32)],           # per-head outputs
        compiler_params=pltpu.CompilerParams(
            dimension_semantics=("parallel",),
            vmem_limit_bytes=vmem_limit),
    )(xb, p["g1"], p["be1"], wq_t, wkv_t, bq, bkv, wo_t, bo)

    # ---- MoE MLP over flat tokens (free reshape; no padding concat) ----
    N = B * S
    tokens = y.reshape(N, D)

    GP = max(128, ((E + 127) // 128) * 128)              # lane-padded gate width
    wg_pad = jnp.zeros((D, GP), f32).at[:, :E].set(p["gate_w"].T.astype(f32))
    bg_pad = jnp.full((1, GP), -1e30, f32).at[:, :E].set(
        p["gate_b"].reshape(1, E).astype(f32))

    w1 = p["w1"].astype(bf16)                            # (E, H, D) -- no transpose
    w2 = p["w2"].astype(bf16)                            # (E, D, H) -- no transpose
    H = w1.shape[1]
    b1 = p["b1"].reshape(E, 1, H).astype(f32)
    b2 = p["b2"].reshape(E, 1, D).astype(f32)

    # Token tile sized from the VMEM budget (bigger tiles on v5e/v6e).
    cap_tile = 1024 if vmem_limit >= 96 * _MIB else 512
    TN = N if N <= cap_tile else cap_tile

    out = pl.pallas_call(
        functools.partial(moe_block_kernel, E),
        grid=(pl.cdiv(N, TN),),                          # partial last tile masked
        in_specs=[
            pl.BlockSpec((TN, D), lambda i: (i, 0)),     # streamed tokens
            _const_spec((1, D)), _const_spec((1, D)),    # LN params
            _const_spec((D, GP)), _const_spec((1, GP)),  # padded gate
            _const_spec((E, H, D)), _const_spec((E, 1, H)),
            _const_spec((E, D, H)), _const_spec((E, 1, D)),
        ],
        out_specs=pl.BlockSpec((TN, D), lambda i: (i, 0)),
        out_shape=jax.ShapeDtypeStruct((N, D), f32),
        compiler_params=pltpu.CompilerParams(
            dimension_semantics=("parallel",),
            vmem_limit_bytes=vmem_limit),
    )(tokens, p["g2"], p["be2"], wg_pad, bg_pad, w1, b1, w2, b2)

    return jnp.transpose(out.reshape(B, S, D), (1, 0, 2))   # back to (S, B, D)


if __name__ == "__main__":
    S, B, D = 8, 2, 32
    num_heads, num_experts = 4, 4
    H = int(D * 4.0)

    key = jax.random.PRNGKey(0)
    ks = jax.random.split(key, 10)
    x = jax.random.normal(ks[0], (S, B, D), jnp.float32)

    params = dict(
        g1=jnp.ones((1, D), jnp.float32),
        be1=jnp.zeros((1, D), jnp.float32),
        in_proj_w=0.05 * jax.random.normal(ks[1], (3 * D, D), jnp.float32),
        in_proj_b=0.01 * jax.random.normal(ks[2], (3 * D,), jnp.float32),
        out_proj_w=0.05 * jax.random.normal(ks[3], (D, D), jnp.float32),
        out_proj_b=0.01 * jax.random.normal(ks[4], (D,), jnp.float32),
        g2=jnp.ones((1, D), jnp.float32),
        be2=jnp.zeros((1, D), jnp.float32),
        gate_w=0.05 * jax.random.normal(ks[5], (num_experts, D), jnp.float32),
        gate_b=jnp.zeros((num_experts,), jnp.float32),
        w1=0.05 * jax.random.normal(ks[6], (num_experts, H, D), jnp.float32),
        b1=0.01 * jax.random.normal(ks[7], (num_experts, H), jnp.float32),
        w2=0.05 * jax.random.normal(ks[8], (num_experts, D, H), jnp.float32),
        b2=0.01 * jax.random.normal(ks[9], (num_experts, D), jnp.float32),
    )

    out = moe_vit_block(x, params, num_heads=num_heads, num_experts=num_experts)
    jax.block_until_ready(out)
    assert out.shape == (S, B, D) and out.dtype == jnp.float32
    assert bool(jnp.isfinite(out).all())
    print("KERNEL_OK")
</pallas_src>

<mosaic_0001>
module attributes {stable_mosaic.version = 11 : i64} {
  func.func @attn_block_kernel(%arg0: i32, %arg1: memref<1x8x32xf32, #tpu.memory_space<vmem>>, %arg2: memref<1x32xf32, #tpu.memory_space<vmem>>, %arg3: memref<1x32xf32, #tpu.memory_space<vmem>>, %arg4: memref<32x32xbf16, #tpu.memory_space<vmem>>, %arg5: memref<32x64xbf16, #tpu.memory_space<vmem>>, %arg6: memref<1x32xf32, #tpu.memory_space<vmem>>, %arg7: memref<1x64xf32, #tpu.memory_space<vmem>>, %arg8: memref<32x32xbf16, #tpu.memory_space<vmem>>, %arg9: memref<1x32xf32, #tpu.memory_space<vmem>>, %arg10: memref<1x8x32xf32, #tpu.memory_space<vmem>>, %arg11: memref<8x32xf32, #tpu.memory_space<vmem>>) attributes {dimension_semantics = [#tpu.dimension_semantics<parallel>], iteration_bounds = array<i64: 2>, scalar_prefetch = 0 : i64, scratch_operands = 1 : i64, tpu.core_type = #tpu.core_type<tc>, window_params = [{transform_indices = @transform_0, window_bounds = array<i64: 1, 8, 32>}, {pipeline_mode = #tpu.pipeline_mode<synchronous>, transform_indices = @transform_1, window_bounds = array<i64: 1, 32>}, {pipeline_mode = #tpu.pipeline_mode<synchronous>, transform_indices = @transform_2, window_bounds = array<i64: 1, 32>}, {pipeline_mode = #tpu.pipeline_mode<synchronous>, transform_indices = @transform_3, window_bounds = array<i64: 32, 32>}, {pipeline_mode = #tpu.pipeline_mode<synchronous>, transform_indices = @transform_4, window_bounds = array<i64: 32, 64>}, {pipeline_mode = #tpu.pipeline_mode<synchronous>, transform_indices = @transform_5, window_bounds = array<i64: 1, 32>}, {pipeline_mode = #tpu.pipeline_mode<synchronous>, transform_indices = @transform_6, window_bounds = array<i64: 1, 64>}, {pipeline_mode = #tpu.pipeline_mode<synchronous>, transform_indices = @transform_7, window_bounds = array<i64: 32, 32>}, {pipeline_mode = #tpu.pipeline_mode<synchronous>, transform_indices = @transform_8, window_bounds = array<i64: 1, 32>}, {transform_indices = @transform_9, window_bounds = array<i64: 1, 8, 32>}]} {
    %c0 = arith.constant 0 : index
    %c0_0 = arith.constant 0 : index
    %c0_1 = arith.constant 0 : index
    %0 = vector.load %arg1[%c0, %c0_0, %c0_1] : memref<1x8x32xf32, #tpu.memory_space<vmem>>, vector<1x8x32xf32>
    %1 = vector.shape_cast %0 : vector<1x8x32xf32> to vector<8x32xf32>
    %c0_2 = arith.constant 0 : index
    %c0_3 = arith.constant 0 : index
    %2 = vector.load %arg2[%c0_2, %c0_3] : memref<1x32xf32, #tpu.memory_space<vmem>>, vector<1x32xf32>
    %c0_4 = arith.constant 0 : index
    %c0_5 = arith.constant 0 : index
    %3 = vector.load %arg3[%c0_4, %c0_5] : memref<1x32xf32, #tpu.memory_space<vmem>>, vector<1x32xf32>
    %cst = arith.constant dense<0.000000e+00> : vector<8xf32>
    %4 = vector.multi_reduction <add>, %1, %cst [1] : vector<8x32xf32> to vector<8xf32>
    %5 = vector.shape_cast %4 : vector<8xf32> to vector<8x1xf32>
    %cst_6 = arith.constant 3.200000e+01 : f32
    %6 = vector.broadcast %cst_6 : f32 to vector<8x1xf32>
    %7 = arith.divf %5, %6 : vector<8x1xf32>
    %8 = vector.broadcast %7 : vector<8x1xf32> to vector<8x32xf32>
    %9 = arith.subf %1, %8 : vector<8x32xf32>
    %10 = arith.mulf %9, %9 : vector<8x32xf32>
    %cst_7 = arith.constant dense<0.000000e+00> : vector<8xf32>
    %11 = vector.multi_reduction <add>, %10, %cst_7 [1] : vector<8x32xf32> to vector<8xf32>
    %12 = vector.shape_cast %11 : vector<8xf32> to vector<8x1xf32>
    %cst_8 = arith.constant 3.200000e+01 : f32
    %13 = vector.broadcast %cst_8 : f32 to vector<8x1xf32>
    %14 = arith.divf %12, %13 : vector<8x1xf32>
    %15 = vector.broadcast %7 : vector<8x1xf32> to vector<8x32xf32>
    %16 = arith.subf %1, %15 : vector<8x32xf32>
    %cst_9 = arith.constant 9.99999974E-6 : f32
    %17 = vector.broadcast %cst_9 : f32 to vector<8x1xf32>
    %18 = arith.addf %14, %17 : vector<8x1xf32>
    %19 = math.rsqrt %18 : vector<8x1xf32>
    %20 = vector.broadcast %19 : vector<8x1xf32> to vector<8x32xf32>
    %21 = arith.mulf %16, %20 : vector<8x32xf32>
    %22 = vector.broadcast %2 : vector<1x32xf32> to vector<8x32xf32>
    %23 = arith.mulf %21, %22 : vector<8x32xf32>
    %24 = vector.broadcast %3 : vector<1x32xf32> to vector<8x32xf32>
    %25 = arith.addf %23, %24 : vector<8x32xf32>
    %26 = arith.truncf %25 : vector<8x32xf32> to vector<8x32xbf16>
    %c0_10 = arith.constant 0 : index
    %c0_11 = arith.constant 0 : index
    %27 = vector.load %arg4[%c0_10, %c0_11] : memref<32x32xbf16, #tpu.memory_space<vmem>>, vector<32x32xbf16>
    %cst_12 = arith.constant dense<0.000000e+00> : vector<8x32xf32>
    %28 = tpu.matmul %26, %27, %cst_12 {dimension_numbers = #tpu.dot_dimension_numbers<[1], [0], [0], [1], [0, 0, 1, 1], [], []>} : vector<8x32xbf16>, vector<32x32xbf16>, vector<8x32xf32> -> vector<8x32xf32>
    %c0_13 = arith.constant 0 : index
    %c0_14 = arith.constant 0 : index
    %29 = vector.load %arg6[%c0_13, %c0_14] : memref<1x32xf32, #tpu.memory_space<vmem>>, vector<1x32xf32>
    %30 = vector.broadcast %29 : vector<1x32xf32> to vector<8x32xf32>
    %31 = arith.addf %28, %30 : vector<8x32xf32>
    %32 = arith.truncf %1 : vector<8x32xf32> to vector<8x32xbf16>
    %c0_15 = arith.constant 0 : index
    %c0_16 = arith.constant 0 : index
    %33 = vector.load %arg5[%c0_15, %c0_16] : memref<32x64xbf16, #tpu.memory_space<vmem>>, vector<32x64xbf16>
    %cst_17 = arith.constant dense<0.000000e+00> : vector<8x64xf32>
    %34 = tpu.matmul %32, %33, %cst_17 {dimension_numbers = #tpu.dot_dimension_numbers<[1], [0], [0], [1], [0, 0, 1, 1], [], []>} : vector<8x32xbf16>, vector<32x64xbf16>, vector<8x64xf32> -> vector<8x64xf32>
    %c0_18 = arith.constant 0 : index
    %c0_19 = arith.constant 0 : index
    %35 = vector.load %arg7[%c0_18, %c0_19] : memref<1x64xf32, #tpu.memory_space<vmem>>, vector<1x64xf32>
    %36 = vector.broadcast %35 : vector<1x64xf32> to vector<8x64xf32>
    %37 = arith.addf %34, %36 : vector<8x64xf32>
    %38 = arith.truncf %31 : vector<8x32xf32> to vector<8x32xbf16>
    %39 = arith.truncf %37 : vector<8x64xf32> to vector<8x64xbf16>
    %40 = vector.extract_strided_slice %38 {offsets = [0, 0], sizes = [8, 8], strides = [1, 1]} : vector<8x32xbf16> to vector<8x8xbf16>
    %41 = vector.extract_strided_slice %39 {offsets = [0, 0], sizes = [8, 8], strides = [1, 1]} : vector<8x64xbf16> to vector<8x8xbf16>
    %42 = vector.extract_strided_slice %39 {offsets = [0, 32], sizes = [8, 8], strides = [1, 1]} : vector<8x64xbf16> to vector<8x8xbf16>
    %cst_20 = arith.constant dense<0.000000e+00> : vector<8x8xf32>
    %43 = tpu.matmul %40, %41, %cst_20 {dimension_numbers = #tpu.dot_dimension_numbers<[1], [1], [0], [0], [0, 0, 1, 0], [], []>} : vector<8x8xbf16>, vector<8x8xbf16>, vector<8x8xf32> -> vector<8x8xf32>
    %cst_21 = arith.constant 0.353553385 : f32
    %44 = vector.broadcast %cst_21 : f32 to vector<8x8xf32>
    %45 = arith.mulf %43, %44 : vector<8x8xf32>
    %cst_22 = arith.constant dense<0xFF800000> : vector<8xf32>
    %46 = vector.multi_reduction <maximumf>, %45, %cst_22 [1] : vector<8x8xf32> to vector<8xf32>
    %47 = vector.shape_cast %46 : vector<8xf32> to vector<8x1xf32>
    %48 = vector.broadcast %47 : vector<8x1xf32> to vector<8x8xf32>
    %49 = arith.subf %45, %48 : vector<8x8xf32>
    %50 = math.exp %49 : vector<8x8xf32>
    %cst_23 = arith.constant dense<0.000000e+00> : vector<8xf32>
    %51 = vector.multi_reduction <add>, %50, %cst_23 [1] : vector<8x8xf32> to vector<8xf32>
    %52 = vector.shape_cast %51 : vector<8xf32> to vector<8x1xf32>
    %53 = tpu.reciprocal %52 {approx = true} : vector<8x1xf32> -> vector<8x1xf32>
    %54 = vector.broadcast %53 : vector<8x1xf32> to vector<8x8xf32>
    %55 = arith.mulf %50, %54 : vector<8x8xf32>
    %56 = arith.truncf %55 : vector<8x8xf32> to vector<8x8xbf16>
    %cst_24 = arith.constant dense<0.000000e+00> : vector<8x8xf32>
    %57 = tpu.matmul %56, %42, %cst_24 {dimension_numbers = #tpu.dot_dimension_numbers<[1], [0], [0], [1], [0, 0, 1, 1], [], []>} : vector<8x8xbf16>, vector<8x8xbf16>, vector<8x8xf32> -> vector<8x8xf32>
    %c0_25 = arith.constant 0 : index
    %c0_26 = arith.constant 0 : index
    %58 = vector.load %arg11[%c0_25, %c0_26] : memref<8x32xf32, #tpu.memory_space<vmem>>, vector<8x8xf32>
    tpu.vector_store %arg11[%c0_25, %c0_26], %57 {strides = array<i32>} : memref<8x32xf32, #tpu.memory_space<vmem>>, vector<8x8xf32>,
    %59 = vector.extract_strided_slice %38 {offsets = [0, 8], sizes = [8, 8], strides = [1, 1]} : vector<8x32xbf16> to vector<8x8xbf16>
    %60 = vector.extract_strided_slice %39 {offsets = [0, 8], sizes = [8, 8], strides = [1, 1]} : vector<8x64xbf16> to vector<8x8xbf16>
    %61 = vector.extract_strided_slice %39 {offsets = [0, 40], sizes = [8, 8], strides = [1, 1]} : vector<8x64xbf16> to vector<8x8xbf16>
    %cst_27 = arith.constant dense<0.000000e+00> : vector<8x8xf32>
    %62 = tpu.matmul %59, %60, %cst_27 {dimension_numbers = #tpu.dot_dimension_numbers<[1], [1], [0], [0], [0, 0, 1, 0], [], []>} : vector<8x8xbf16>, vector<8x8xbf16>, vector<8x8xf32> -> vector<8x8xf32>
    %cst_28 = arith.constant 0.353553385 : f32
    %63 = vector.broadcast %cst_28 : f32 to vector<8x8xf32>
    %64 = arith.mulf %62, %63 : vector<8x8xf32>
    %cst_29 = arith.constant dense<0xFF800000> : vector<8xf32>
    %65 = vector.multi_reduction <maximumf>, %64, %cst_29 [1] : vector<8x8xf32> to vector<8xf32>
    %66 = vector.shape_cast %65 : vector<8xf32> to vector<8x1xf32>
    %67 = vector.broadcast %66 : vector<8x1xf32> to vector<8x8xf32>
    %68 = arith.subf %64, %67 : vector<8x8xf32>
    %69 = math.exp %68 : vector<8x8xf32>
    %cst_30 = arith.constant dense<0.000000e+00> : vector<8xf32>
    %70 = vector.multi_reduction <add>, %69, %cst_30 [1] : vector<8x8xf32> to vector<8xf32>
    %71 = vector.shape_cast %70 : vector<8xf32> to vector<8x1xf32>
    %72 = tpu.reciprocal %71 {approx = true} : vector<8x1xf32> -> vector<8x1xf32>
    %73 = vector.broadcast %72 : vector<8x1xf32> to vector<8x8xf32>
    %74 = arith.mulf %69, %73 : vector<8x8xf32>
    %75 = arith.truncf %74 : vector<8x8xf32> to vector<8x8xbf16>
    %cst_31 = arith.constant dense<0.000000e+00> : vector<8x8xf32>
    %76 = tpu.matmul %75, %61, %cst_31 {dimension_numbers = #tpu.dot_dimension_numbers<[1], [0], [0], [1], [0, 0, 1, 1], [], []>} : vector<8x8xbf16>, vector<8x8xbf16>, vector<8x8xf32> -> vector<8x8xf32>
    %c0_32 = arith.constant 0 : index
    %c8 = arith.constant 8 : index
    %77 = vector.load %arg11[%c0_32, %c8] : memref<8x32xf32, #tpu.memory_space<vmem>>, vector<8x8xf32>
    tpu.vector_store %arg11[%c0_32, %c8], %76 {strides = array<i32>} : memref<8x32xf32, #tpu.memory_space<vmem>>, vector<8x8xf32>,
    %78 = vector.extract_strided_slice %38 {offsets = [0, 16], sizes = [8, 8], strides = [1, 1]} : vector<8x32xbf16> to vector<8x8xbf16>
    %79 = vector.extract_strided_slice %39 {offsets = [0, 16], sizes = [8, 8], strides = [1, 1]} : vector<8x64xbf16> to vector<8x8xbf16>
    %80 = vector.extract_strided_slice %39 {offsets = [0, 48], sizes = [8, 8], strides = [1, 1]} : vector<8x64xbf16> to vector<8x8xbf16>
    %cst_33 = arith.constant dense<0.000000e+00> : vector<8x8xf32>
    %81 = tpu.matmul %78, %79, %cst_33 {dimension_numbers = #tpu.dot_dimension_numbers<[1], [1], [0], [0], [0, 0, 1, 0], [], []>} : vector<8x8xbf16>, vector<8x8xbf16>, vector<8x8xf32> -> vector<8x8xf32>
    %cst_34 = arith.constant 0.353553385 : f32
    %82 = vector.broadcast %cst_34 : f32 to vector<8x8xf32>
    %83 = arith.mulf %81, %82 : vector<8x8xf32>
    %cst_35 = arith.constant dense<0xFF800000> : vector<8xf32>
    %84 = vector.multi_reduction <maximumf>, %83, %cst_35 [1] : vector<8x8xf32> to vector<8xf32>
    %85 = vector.shape_cast %84 : vector<8xf32> to vector<8x1xf32>
    %86 = vector.broadcast %85 : vector<8x1xf32> to vector<8x8xf32>
    %87 = arith.subf %83, %86 : vector<8x8xf32>
    %88 = math.exp %87 : vector<8x8xf32>
    %cst_36 = arith.constant dense<0.000000e+00> : vector<8xf32>
    %89 = vector.multi_reduction <add>, %88, %cst_36 [1] : vector<8x8xf32> to vector<8xf32>
    %90 = vector.shape_cast %89 : vector<8xf32> to vector<8x1xf32>
    %91 = tpu.reciprocal %90 {approx = true} : vector<8x1xf32> -> vector<8x1xf32>
    %92 = vector.broadcast %91 : vector<8x1xf32> to vector<8x8xf32>
    %93 = arith.mulf %88, %92 : vector<8x8xf32>
    %94 = arith.truncf %93 : vector<8x8xf32> to vector<8x8xbf16>
    %cst_37 = arith.constant dense<0.000000e+00> : vector<8x8xf32>
    %95 = tpu.matmul %94, %80, %cst_37 {dimension_numbers = #tpu.dot_dimension_numbers<[1], [0], [0], [1], [0, 0, 1, 1], [], []>} : vector<8x8xbf16>, vector<8x8xbf16>, vector<8x8xf32> -> vector<8x8xf32>
    %c0_38 = arith.constant 0 : index
    %c16 = arith.constant 16 : index
    %96 = vector.load %arg11[%c0_38, %c16] : memref<8x32xf32, #tpu.memory_space<vmem>>, vector<8x8xf32>
    tpu.vector_store %arg11[%c0_38, %c16], %95 {strides = array<i32>} : memref<8x32xf32, #tpu.memory_space<vmem>>, vector<8x8xf32>,
    %97 = vector.extract_strided_slice %38 {offsets = [0, 24], sizes = [8, 8], strides = [1, 1]} : vector<8x32xbf16> to vector<8x8xbf16>
    %98 = vector.extract_strided_slice %39 {offsets = [0, 24], sizes = [8, 8], strides = [1, 1]} : vector<8x64xbf16> to vector<8x8xbf16>
    %99 = vector.extract_strided_slice %39 {offsets = [0, 56], sizes = [8, 8], strides = [1, 1]} : vector<8x64xbf16> to vector<8x8xbf16>
    %cst_39 = arith.constant dense<0.000000e+00> : vector<8x8xf32>
    %100 = tpu.matmul %97, %98, %cst_39 {dimension_numbers = #tpu.dot_dimension_numbers<[1], [1], [0], [0], [0, 0, 1, 0], [], []>} : vector<8x8xbf16>, vector<8x8xbf16>, vector<8x8xf32> -> vector<8x8xf32>
    %cst_40 = arith.constant 0.353553385 : f32
    %101 = vector.broadcast %cst_40 : f32 to vector<8x8xf32>
    %102 = arith.mulf %100, %101 : vector<8x8xf32>
    %cst_41 = arith.constant dense<0xFF800000> : vector<8xf32>
    %103 = vector.multi_reduction <maximumf>, %102, %cst_41 [1] : vector<8x8xf32> to vector<8xf32>
    %104 = vector.shape_cast %103 : vector<8xf32> to vector<8x1xf32>
    %105 = vector.broadcast %104 : vector<8x1xf32> to vector<8x8xf32>
    %106 = arith.subf %102, %105 : vector<8x8xf32>
    %107 = math.exp %106 : vector<8x8xf32>
    %cst_42 = arith.constant dense<0.000000e+00> : vector<8xf32>
    %108 = vector.multi_reduction <add>, %107, %cst_42 [1] : vector<8x8xf32> to vector<8xf32>
    %109 = vector.shape_cast %108 : vector<8xf32> to vector<8x1xf32>
    %110 = tpu.reciprocal %109 {approx = true} : vector<8x1xf32> -> vector<8x1xf32>
    %111 = vector.broadcast %110 : vector<8x1xf32> to vector<8x8xf32>
    %112 = arith.mulf %107, %111 : vector<8x8xf32>
    %113 = arith.truncf %112 : vector<8x8xf32> to vector<8x8xbf16>
    %cst_43 = arith.constant dense<0.000000e+00> : vector<8x8xf32>
    %114 = tpu.matmul %113, %99, %cst_43 {dimension_numbers = #tpu.dot_dimension_numbers<[1], [0], [0], [1], [0, 0, 1, 1], [], []>} : vector<8x8xbf16>, vector<8x8xbf16>, vector<8x8xf32> -> vector<8x8xf32>
    %c0_44 = arith.constant 0 : index
    %c24 = arith.constant 24 : index
    %115 = vector.load %arg11[%c0_44, %c24] : memref<8x32xf32, #tpu.memory_space<vmem>>, vector<8x8xf32>
    tpu.vector_store %arg11[%c0_44, %c24], %114 {strides = array<i32>} : memref<8x32xf32, #tpu.memory_space<vmem>>, vector<8x8xf32>,
    %c0_45 = arith.constant 0 : index
    %c0_46 = arith.constant 0 : index
    %116 = vector.load %arg11[%c0_45, %c0_46] : memref<8x32xf32, #tpu.memory_space<vmem>>, vector<8x32xf32>
    %117 = arith.truncf %116 : vector<8x32xf32> to vector<8x32xbf16>
    %c0_47 = arith.constant 0 : index
    %c0_48 = arith.constant 0 : index
    %118 = vector.load %arg8[%c0_47, %c0_48] : memref<32x32xbf16, #tpu.memory_space<vmem>>, vector<32x32xbf16>
    %cst_49 = arith.constant dense<0.000000e+00> : vector<8x32xf32>
    %119 = tpu.matmul %117, %118, %cst_49 {dimension_numbers = #tpu.dot_dimension_numbers<[1], [0], [0], [1], [0, 0, 1, 1], [], []>} : vector<8x32xbf16>, vector<32x32xbf16>, vector<8x32xf32> -> vector<8x32xf32>
    %120 = arith.addf %1, %119 : vector<8x32xf32>
    %c0_50 = arith.constant 0 : index
    %c0_51 = arith.constant 0 : index
    %121 = vector.load %arg9[%c0_50, %c0_51] : memref<1x32xf32, #tpu.memory_space<vmem>>, vector<1x32xf32>
    %122 = vector.broadcast %121 : vector<1x32xf32> to vector<8x32xf32>
    %123 = arith.addf %120, %122 : vector<8x32xf32>
    %c0_52 = arith.constant 0 : index
    %c0_53 = arith.constant 0 : index
    %c0_54 = arith.constant 0 : index
    %124 = vector.load %arg10[%c0_52, %c0_53, %c0_54] : memref<1x8x32xf32, #tpu.memory_space<vmem>>, vector<1x8x32xf32>
    %125 = vector.shape_cast %124 : vector<1x8x32xf32> to vector<8x32xf32>
    %126 = vector.shape_cast %123 : vector<8x32xf32> to vector<1x8x32xf32>
    tpu.vector_store %arg10[%c0_52, %c0_53, %c0_54], %126 {strides = array<i32>} : memref<1x8x32xf32, #tpu.memory_space<vmem>>, vector<1x8x32xf32>,
    return
  }
  func.func @transform_0(%arg0: i32) -> (i32, i32, i32) {
    %c0_i32 = arith.constant 0 : i32
    %c0_i32_0 = arith.constant 0 : i32
    %c0_i32_1 = arith.constant 0 : i32
    return %arg0, %c0_i32, %c0_i32_0 : i32, i32, i32
  }
  func.func @transform_1(%arg0: i32) -> (i32, i32) {
    %c0_i32 = arith.constant 0 : i32
    %c0_i32_0 = arith.constant 0 : i32
    %c0_i32_1 = arith.constant 0 : i32
    return %c0_i32, %c0_i32_0 : i32, i32
  }
  func.func @transform_2(%arg0: i32) -> (i32, i32) {
    %c0_i32 = arith.constant 0 : i32
    %c0_i32_0 = arith.constant 0 : i32
    %c0_i32_1 = arith.constant 0 : i32
    return %c0_i32, %c0_i32_0 : i32, i32
  }
  func.func @transform_3(%arg0: i32) -> (i32, i32) {
    %c0_i32 = arith.constant 0 : i32
    %c0_i32_0 = arith.constant 0 : i32
    %c0_i32_1 = arith.constant 0 : i32
    return %c0_i32, %c0_i32_0 : i32, i32
  }
  func.func @transform_4(%arg0: i32) -> (i32, i32) {
    %c0_i32 = arith.constant 0 : i32
    %c0_i32_0 = arith.constant 0 : i32
    %c0_i32_1 = arith.constant 0 : i32
    return %c0_i32, %c0_i32_0 : i32, i32
  }
  func.func @transform_5(%arg0: i32) -> (i32, i32) {
    %c0_i32 = arith.constant 0 : i32
    %c0_i32_0 = arith.constant 0 : i32
    %c0_i32_1 = arith.constant 0 : i32
    return %c0_i32, %c0_i32_0 : i32, i32
  }
  func.func @transform_6(%arg0: i32) -> (i32, i32) {
    %c0_i32 = arith.constant 0 : i32
    %c0_i32_0 = arith.constant 0 : i32
    %c0_i32_1 = arith.constant 0 : i32
    return %c0_i32, %c0_i32_0 : i32, i32
  }
  func.func @transform_7(%arg0: i32) -> (i32, i32) {
    %c0_i32 = arith.constant 0 : i32
    %c0_i32_0 = arith.constant 0 : i32
    %c0_i32_1 = arith.constant 0 : i32
    return %c0_i32, %c0_i32_0 : i32, i32
  }
  func.func @transform_8(%arg0: i32) -> (i32, i32) {
    %c0_i32 = arith.constant 0 : i32
    %c0_i32_0 = arith.constant 0 : i32
    %c0_i32_1 = arith.constant 0 : i32
    return %c0_i32, %c0_i32_0 : i32, i32
  }
  func.func @transform_9(%arg0: i32) -> (i32, i32, i32) {
    %c0_i32 = arith.constant 0 : i32
    %c0_i32_0 = arith.constant 0 : i32
    %c0_i32_1 = arith.constant 0 : i32
    return %arg0, %c0_i32, %c0_i32_0 : i32, i32, i32
  }
}

</mosaic_0001>

<llo_original>
// kernel: tpu_custom_call.1
$region0: #{tpu_custom_call.1}
  #allocation0 [shape = 'u32[]', space=smem, size = 0x4, offset = 0x4, fixed_abs, tag = 'smem constant byte address 0x4 - core index']
  #allocation1 [shape = 'u32[144,128]{1,0:T(1,128)}', space=vmem, size = 0x12000, scoped, tag = 'internal scratch']
  #allocation2 [shape = 'f32[8,32]{1,0:T(8,128)}', space=vmem, size = 0x1000, scoped, tag = 'scratch operand']
  %s0 = inlined_call_operand.hbm [shape: f32[2,8,32], index: 0, kind: input, shape index: {}]
  %s1 = inlined_call_operand.vmem [shape: f32[1,32], index: 1, kind: input, shape index: {}]
  %s2 = inlined_call_operand.vmem [shape: f32[1,32], index: 2, kind: input, shape index: {}]
  %s3 = inlined_call_operand.hbm [shape: bf16[32,32], index: 3, kind: input, shape index: {}]
  %s4 = inlined_call_operand.hbm [shape: bf16[32,64], index: 4, kind: input, shape index: {}]
  %s5 = inlined_call_operand.vmem [shape: f32[1,32], index: 5, kind: input, shape index: {}]
  %s6 = inlined_call_operand.vmem [shape: f32[1,64], index: 6, kind: input, shape index: {}]
  %s7 = inlined_call_operand.vmem [shape: bf16[32,32], index: 7, kind: input, shape index: {}]
  %s8 = inlined_call_operand.vmem [shape: f32[1,32], index: 8, kind: input, shape index: {}]
  %s9 = inlined_call_operand.hbm [shape: f32[2,8,32], index: 9, kind: output, shape index: {}]
  %s10 = sld [smem:[#allocation0]]
  $region81: #{tpu_custom_call.1} parent=0
    _
  %s12 = ssub.s32 1, %s10
  %s13 = scalar_select 0, %s12, %s10
  $region1: #{tpu_custom_call.1} parent=0
    #allocation3 [shape = 'u8[8192]{0}', space=vmem, size = 0x2000, scoped, tag = 'input window, operand 0']
    #allocation4 [shape = 's32[2]{0}', space=sflag, size = 0x8, scoped, tag = 'scoped memory for tpu_custom_call.1']
    #allocation5 [shape = 's32[2]{0}', space=sflag, size = 0x8, scoped, tag = 'scoped memory for tpu_custom_call.1']
    #allocation6 [shape = 'u8[8192]{0}', space=vmem, size = 0x2000, scoped, tag = 'input window, operand 3, single buffered']
    #allocation7 [shape = 's32[1]{0}', space=sflag, size = 0x4, scoped, tag = 'scoped memory for tpu_custom_call.1']
    #allocation8 [shape = 'u8[8192]{0}', space=vmem, size = 0x2000, scoped, tag = 'input window, operand 4, single buffered']
    #allocation9 [shape = 'u8[8192]{0}', space=vmem, size = 0x2000, scoped, tag = 'output window, operand 0']
    %14 = vsyncpa [#allocation4], 0
    %s15 = scalar_lea.sflag [#allocation4], 1
    %16 = vsyncpa %s15, 0
    %17 = vsyncpa [#allocation7], 0
    %18 = vsyncpa [#allocation5], 0
    %s19 = scalar_lea.sflag [#allocation5], 1
    %20 = vsyncpa %s19, 0
    loop: start=0, step=1, limit=4
    $region2: #{tpu_custom_call.1} parent=1 // loop_pre_header
      _
    $region3: #{tpu_custom_call.1} parent=1 // loop_header
      %s22 = sphi 0, %s26
      %p23 = scmp.ge.s32.totalorder %s22, 4
      %s32 = sphi 0, %s34
      %s35 = sphi 0, %s32
      %s36 = sphi 0, %s35
      %s52 = sphi 0, %s36
      %s56 = sphi 0, %s56
      %s58 = sphi 0, %s56
      %s59 = sphi 0, %s58
      %s73 = sphi 0, %s59
      %s77 = sphi 0, %s77
      %s79 = sphi 0, %s77
      %s80 = sphi 0, %s79
      %s94 = sphi 0, %s80
      %s98 = sphi 0, %s98
      %s100 = sphi 0, %s98
      %s101 = sphi 0, %s100
      %s115 = sphi 0, %s101
      %s119 = sphi 0, %s119
      %s121 = sphi 0, %s119
      %s122 = sphi 0, %s121
      %s136 = sphi 0, %s122
      %s140 = sphi 0, %s140
      %s142 = sphi 0, %s140
      %s143 = sphi 0, %s142
      %s157 = sphi 0, %s143
      %s161 = sphi 0, %s161
      %s163 = sphi 0, %s161
      %s164 = sphi 0, %s163
      %s178 = sphi 0, %s164
      %s182 = sphi 0, %s182
      %s184 = sphi 0, %s182
      %s185 = sphi 0, %s184
      %s199 = sphi 0, %s185
      %s203 = sphi 0, %s203
      %s205 = sphi 0, %s203
      %s206 = sphi 0, %s205
      %s220 = sphi 0, %s206
      %s226 = sphi 0, %s228
      %s229 = sphi 0, %s226
      %s230 = sphi 0, %s229
      %s246 = sphi 0, %s230
    $region4: #{tpu_custom_call.1} parent=1 // loop_header_branch
      %25 = sbr.rel (%p23) target = $region8
    $region5: #{tpu_custom_call.1} parent=1 // loop_body
      %s27 = ssub.s32 %s22, 1
      %s28 = ssub.s32 %s22, 2
      %s29 = sadd.s32 %s22, 1
      %s30 = ssub.s32 %s22, %s29
      %p31 = scmp.eq.s32.totalorder %s30, 0
      %s33 = sadd.s32 %s32, 1
      %s34 = scalar_select %p31, %s32, %s33
      %p37 = pneg %p31
      %p38 = scmp.eq.s32.totalorder %s22, 1
      %p39 = por %p37, %p38
      %p40 = scmp.ne.s32.totalorder %s32, %s35
      %p41 = scmp.eq.s32.totalorder %s22, 0
      %p42 = por %p40, %p41
      %p43 = scmp.ne.s32.totalorder %s32, %s35
      %p44 = scmp.eq.s32.totalorder %s27, 1
      %p45 = por %p43, %p44
      %p46 = scmp.ne.s32.totalorder %s35, %s36
      %p47 = scmp.eq.s32.totalorder %s27, 0
      %p48 = por %p46, %p47
      %p49 = scmp.ne.s32.totalorder %s35, %s36
      %p50 = scmp.eq.s32.totalorder %s28, 1
      %p51 = por %p49, %p50
      %p53 = scmp.ne.s32.totalorder %s36, %s52
      %p54 = scmp.eq.s32.totalorder %s28, 0
      %p55 = por %p53, %p54
      %s57 = sadd.s32 %s56, 1
      %p60 = scmp.eq.s32.totalorder %s22, 1
      %p61 = scmp.ne.s32.totalorder %s56, %s58
      %p62 = scmp.eq.s32.totalorder %s22, 0
      %p63 = por %p61, %p62
      %p64 = scmp.ne.s32.totalorder %s56, %s58
      %p65 = scmp.eq.s32.totalorder %s27, 1
      %p66 = por %p64, %p65
      %p67 = scmp.ne.s32.totalorder %s58, %s59
      %p68 = scmp.eq.s32.totalorder %s27, 0
      %p69 = por %p67, %p68
      %p70 = scmp.ne.s32.totalorder %s58, %s59
      %p71 = scmp.eq.s32.totalorder %s28, 1
      %p72 = por %p70, %p71
      %p74 = scmp.ne.s32.totalorder %s59, %s73
      %p75 = scmp.eq.s32.totalorder %s28, 0
      %p76 = por %p74, %p75
      %s78 = sadd.s32 %s77, 1
      %p81 = scmp.eq.s32.totalorder %s22, 1
      %p82 = scmp.ne.s32.totalorder %s77, %s79
      %p83 = scmp.eq.s32.totalorder %s22, 0
      %p84 = por %p82, %p83
      %p85 = scmp.ne.s32.totalorder %s77, %s79
      %p86 = scmp.eq.s32.totalorder %s27, 1
      %p87 = por %p85, %p86
      %p88 = scmp.ne.s32.totalorder %s79, %s80
      %p89 = scmp.eq.s32.totalorder %s27, 0
      %p90 = por %p88, %p89
      %p91 = scmp.ne.s32.totalorder %s79, %s80
      %p92 = scmp.eq.s32.totalorder %s28, 1
      %p93 = por %p91, %p92
      %p95 = scmp.ne.s32.totalorder %s80, %s94
      %p96 = scmp.eq.s32.totalorder %s28, 0
      %p97 = por %p95, %p96
      %s99 = sadd.s32 %s98, 1
      %p102 = scmp.eq.s32.totalorder %s22, 1
      %p103 = scmp.ne.s32.totalorder %s98, %s100
      %p104 = scmp.eq.s32.totalorder %s22, 0
      %p105 = por %p103, %p104
      %p106 = scmp.ne.s32.totalorder %s98, %s100
      %p107 = scmp.eq.s32.totalorder %s27, 1
      %p108 = por %p106, %p107
      %p109 = scmp.ne.s32.totalorder %s100, %s101
      %p110 = scmp.eq.s32.totalorder %s27, 0
      %p111 = por %p109, %p110
      %p112 = scmp.ne.s32.totalorder %s100, %s101
      %p113 = scmp.eq.s32.totalorder %s28, 1
      %p114 = por %p112, %p113
      %p116 = scmp.ne.s32.totalorder %s101, %s115
      %p117 = scmp.eq.s32.totalorder %s28, 0
      %p118 = por %p116, %p117
      %s120 = sadd.s32 %s119, 1
      %p123 = scmp.eq.s32.totalorder %s22, 1
      %p124 = scmp.ne.s32.totalorder %s119, %s121
      %p125 = scmp.eq.s32.totalorder %s22, 0
      %p126 = por %p124, %p125
      %p127 = scmp.ne.s32.totalorder %s119, %s121
      %p128 = scmp.eq.s32.totalorder %s27, 1
      %p129 = por %p127, %p128
      %p130 = scmp.ne.s32.totalorder %s121, %s122
      %p131 = scmp.eq.s32.totalorder %s27, 0
      %p132 = por %p130, %p131
      %p133 = scmp.ne.s32.totalorder %s121, %s122
      %p134 = scmp.eq.s32.totalorder %s28, 1
      %p135 = por %p133, %p134
      %p137 = scmp.ne.s32.totalorder %s122, %s136
      %p138 = scmp.eq.s32.totalorder %s28, 0
      %p139 = por %p137, %p138
      %s141 = sadd.s32 %s140, 1
      %p144 = scmp.eq.s32.totalorder %s22, 1
      %p145 = scmp.ne.s32.totalorder %s140, %s142
      %p146 = scmp.eq.s32.totalorder %s22, 0
      %p147 = por %p145, %p146
      %p148 = scmp.ne.s32.totalorder %s140, %s142
      %p149 = scmp.eq.s32.totalorder %s27, 1
      %p150 = por %p148, %p149
      %p151 = scmp.ne.s32.totalorder %s142, %s143
      %p152 = scmp.eq.s32.totalorder %s27, 0
      %p153 = por %p151, %p152
      %p154 = scmp.ne.s32.totalorder %s142, %s143
      %p155 = scmp.eq.s32.totalorder %s28, 1
      %p156 = por %p154, %p155
      %p158 = scmp.ne.s32.totalorder %s143, %s157
      %p159 = scmp.eq.s32.totalorder %s28, 0
      %p160 = por %p158, %p159
      %s162 = sadd.s32 %s161, 1
      %p165 = scmp.eq.s32.totalorder %s22, 1
      %p166 = scmp.ne.s32.totalorder %s161, %s163
      %p167 = scmp.eq.s32.totalorder %s22, 0
      %p168 = por %p166, %p167
      %p169 = scmp.ne.s32.totalorder %s161, %s163
      %p170 = scmp.eq.s32.totalorder %s27, 1
      %p171 = por %p169, %p170
      %p172 = scmp.ne.s32.totalorder %s163, %s164
      %p173 = scmp.eq.s32.totalorder %s27, 0
      %p174 = por %p172, %p173
      %p175 = scmp.ne.s32.totalorder %s163, %s164
      %p176 = scmp.eq.s32.totalorder %s28, 1
      %p177 = por %p175, %p176
      %p179 = scmp.ne.s32.totalorder %s164, %s178
      %p180 = scmp.eq.s32.totalorder %s28, 0
      %p181 = por %p179, %p180
      %s183 = sadd.s32 %s182, 1
      %p186 = scmp.eq.s32.totalorder %s22, 1
      %p187 = scmp.ne.s32.totalorder %s182, %s184
      %p188 = scmp.eq.s32.totalorder %s22, 0
      %p189 = por %p187, %p188
      %p190 = scmp.ne.s32.totalorder %s182, %s184
      %p191 = scmp.eq.s32.totalorder %s27, 1
      %p192 = por %p190, %p191
      %p193 = scmp.ne.s32.totalorder %s184, %s185
      %p194 = scmp.eq.s32.totalorder %s27, 0
      %p195 = por %p193, %p194
      %p196 = scmp.ne.s32.totalorder %s184, %s185
      %p197 = scmp.eq.s32.totalorder %s28, 1
      %p198 = por %p196, %p197
      %p200 = scmp.ne.s32.totalorder %s185, %s199
      %p201 = scmp.eq.s32.totalorder %s28, 0
      %p202 = por %p200, %p201
      %s204 = sadd.s32 %s203, 1
      %p207 = scmp.eq.s32.totalorder %s22, 1
      %p208 = scmp.ne.s32.totalorder %s203, %s205
      %p209 = scmp.eq.s32.totalorder %s22, 0
      %p210 = por %p208, %p209
      %p211 = scmp.ne.s32.totalorder %s203, %s205
      %p212 = scmp.eq.s32.totalorder %s27, 1
      %p213 = por %p211, %p212
      %p214 = scmp.ne.s32.totalorder %s205, %s206
      %p215 = scmp.eq.s32.totalorder %s27, 0
      %p216 = por %p214, %p215
      %p217 = scmp.ne.s32.totalorder %s205, %s206
      %p218 = scmp.eq.s32.totalorder %s28, 1
      %p219 = por %p217, %p218
      %p221 = scmp.ne.s32.totalorder %s206, %s220
      %p222 = scmp.eq.s32.totalorder %s28, 0
      %p223 = por %p221, %p222
      %s224 = ssub.s32 %s22, %s29
      %p225 = scmp.eq.s32.totalorder %s224, 0
      %s227 = sadd.s32 %s226, 1
      %s228 = scalar_select %p225, %s226, %s227
      %p231 = pneg %p225
      %p232 = scmp.eq.s32.totalorder %s22, 1
      %p233 = por %p231, %p232
      %p234 = scmp.ne.s32.totalorder %s226, %s229
      %p235 = scmp.eq.s32.totalorder %s22, 0
      %p236 = por %p234, %p235
      %p237 = scmp.ne.s32.totalorder %s226, %s229
      %p238 = scmp.eq.s32.totalorder %s27, 1
      %p239 = por %p237, %p238
      %p240 = scmp.ne.s32.totalorder %s229, %s230
      %p241 = scmp.eq.s32.totalorder %s27, 0
      %p242 = por %p240, %p241
      %p243 = scmp.ne.s32.totalorder %s229, %s230
      %p244 = scmp.eq.s32.totalorder %s28, 1
      %p245 = por %p243, %p244
      %p247 = scmp.ne.s32.totalorder %s230, %s246
      %p248 = scmp.eq.s32.totalorder %s28, 0
      %p249 = por %p247, %p248
      %p250 = scmp.le.s32.totalorder 1, %s22
      %p251 = scmp.lt.s32.totalorder %s22, 3
      %p252 = pnand %p250, %p251
      %p253 = pneg %p252
      // Predicated region
      $region9: #{tpu_custom_call.1} parent=5 // pred_check
        _
      $region10: #{tpu_custom_call.1} parent=5 // pred_check_branch
        %255 = sbr.rel (%p252) target = $region12
      $region11: #{tpu_custom_call.1} parent=5 // pred_region
        %s256 = ssub.s32 %s22, 1
        // Predicated region
        $region13: #{tpu_custom_call.1} parent=11 // pred_check
          %p257 = pneg %p69
        $region14: #{tpu_custom_call.1} parent=11 // pred_check_branch
          %259 = sbr.rel (%p257) target = $region16
        $region15: #{tpu_custom_call.1} parent=11 // pred_region
          _
        $region16: #{tpu_custom_call.1} parent=11 // pred_fallthru
          _
        // Predicated region
        $region17: #{tpu_custom_call.1} parent=11 // pred_check
          %p260 = pneg %p90
        $region18: #{tpu_custom_call.1} parent=11 // pred_check_branch
          %262 = sbr.rel (%p260) target = $region20
        $region19: #{tpu_custom_call.1} parent=11 // pred_region
          _
        $region20: #{tpu_custom_call.1} parent=11 // pred_fallthru
          _
        // Predicated region
        $region21: #{tpu_custom_call.1} parent=11 // pred_check
          %p263 = pneg %p111
        $region22: #{tpu_custom_call.1} parent=11 // pred_check_branch
          %265 = sbr.rel (%p263) target = $region24
        $region23: #{tpu_custom_call.1} parent=11 // pred_region
          %s267 = ssub.s32 256, 256
          %268 = vsyncadd [#allocation7], %s267
          %s269 = sshll.u32 [#allocation6], 4
          %s270 = int_to_ptr.vmem [resolvable:$true] %s269
          %275 = dma.hbm_to_vmem [thread:$0]  %s3, 256, %s270, [#allocation7], 64, 64, 4
        $region24: #{tpu_custom_call.1} parent=11 // pred_fallthru
          _
        // Predicated region
        $region25: #{tpu_custom_call.1} parent=11 // pred_check
          %p276 = pneg %p132
        $region26: #{tpu_custom_call.1} parent=11 // pred_check_branch
          %278 = sbr.rel (%p276) target = $region28
        $region27: #{tpu_custom_call.1} parent=11 // pred_region
          %s280 = ssub.s32 256, 256
          %281 = vsyncadd [#allocation7], %s280
          %s282 = sshll.u32 [#allocation8], 4
          %s283 = int_to_ptr.vmem [resolvable:$true] %s282
          %288 = dma.hbm_to_vmem [thread:$0]  %s4, 256, %s283, [#allocation7], 64, 64, 4
        $region28: #{tpu_custom_call.1} parent=11 // pred_fallthru
          _
        // Predicated region
        $region29: #{tpu_custom_call.1} parent=11 // pred_check
          %p289 = pneg %p153
        $region30: #{tpu_custom_call.1} parent=11 // pred_check_branch
          %291 = sbr.rel (%p289) target = $region32
        $region31: #{tpu_custom_call.1} parent=11 // pred_region
          _
        $region32: #{tpu_custom_call.1} parent=11 // pred_fallthru
          _
        // Predicated region
        $region33: #{tpu_custom_call.1} parent=11 // pred_check
          %p292 = pneg %p174
        $region34: #{tpu_custom_call.1} parent=11 // pred_check_branch
          %294 = sbr.rel (%p292) target = $region36
        $region35: #{tpu_custom_call.1} parent=11 // pred_region
          _
        $region36: #{tpu_custom_call.1} parent=11 // pred_fallthru
          _
        // Predicated region
        $region37: #{tpu_custom_call.1} parent=11 // pred_check
          %p295 = pneg %p195
        $region38: #{tpu_custom_call.1} parent=11 // pred_check_branch
          %297 = sbr.rel (%p295) target = $region40
        $region39: #{tpu_custom_call.1} parent=11 // pred_region
          _
        $region40: #{tpu_custom_call.1} parent=11 // pred_fallthru
          _
        // Predicated region
        $region41: #{tpu_custom_call.1} parent=11 // pred_check
          %p298 = pneg %p216
        $region42: #{tpu_custom_call.1} parent=11 // pred_check_branch
          %300 = sbr.rel (%p298) target = $region44
        $region43: #{tpu_custom_call.1} parent=11 // pred_region
          _
        $region44: #{tpu_custom_call.1} parent=11 // pred_fallthru
          _
      $region12: #{tpu_custom_call.1} parent=5 // pred_fallthru
        _
      %p301 = scmp.lt.s32.totalorder %s22, 2
      // Predicated region
      $region45: #{tpu_custom_call.1} parent=5 // pred_check
        %p302 = pneg %p301
      $region46: #{tpu_custom_call.1} parent=5 // pred_check_branch
        %304 = sbr.rel (%p302) target = $region48
      $region47: #{tpu_custom_call.1} parent=5 // pred_region
        // Predicated region
        $region49: #{tpu_custom_call.1} parent=47 // pred_check
          %p305 = pneg %p42
        $region50: #{tpu_custom_call.1} parent=47 // pred_check_branch
          %307 = sbr.rel (%p305) target = $region52
        $region51: #{tpu_custom_call.1} parent=47 // pred_region
          %s308 = sand.u32 %s32, 1
          %s309 = scalar_lea.sflag [#allocation4], %s308
          %s310 = sand.u32 %s32, 1
          %s311 = smul.addr %s310, 8
          %s312 = scalar_lea.vmem [#allocation3], %s311
          %s314 = ssub.s32 128, 128
          %315 = vsyncadd %s309, %s314
          %s316 = smul.addr %s22, 128
          %s317 = scalar_lea.hbm %s0, %s316
          %s319 = sshll.u32 %s312, 4
          %s320 = int_to_ptr.vmem [resolvable:$true] %s319
          %322 = dma.hbm_to_vmem [thread:$0]  %s317, 128, %s320, %s309
        $region52: #{tpu_custom_call.1} parent=47 // pred_fallthru
          _
      $region48: #{tpu_custom_call.1} parent=5 // pred_fallthru
        _
      %p323 = scmp.le.s32.totalorder 1, %s22
      %p324 = scmp.lt.s32.totalorder %s22, 3
      %p325 = pnand %p323, %p324
      %p326 = pneg %p325
      // Predicated region
      $region53: #{tpu_custom_call.1} parent=5 // pred_check
        _
      $region54: #{tpu_custom_call.1} parent=5 // pred_check_branch
        %328 = sbr.rel (%p325) target = $region56
      $region55: #{tpu_custom_call.1} parent=5 // pred_region
        %s329 = ssub.s32 %s22, 1
        %s330 = sand.u32 %s35, 1
        %s331 = scalar_lea.sflag [#allocation4], %s330
        %s332 = sand.u32 %s35, 1
        %s333 = smul.addr %s332, 8
        %s334 = scalar_lea.vmem [#allocation3], %s333
        // Predicated region
        $region57: #{tpu_custom_call.1} parent=55 // pred_check
          %p335 = pneg %p48
        $region58: #{tpu_custom_call.1} parent=55 // pred_check_branch
          %337 = sbr.rel (%p335) target = $region60
        $region59: #{tpu_custom_call.1} parent=55 // pred_region
          %338 = dma.done %s331, 128
        $region60: #{tpu_custom_call.1} parent=55 // pred_fallthru
          _
        // Predicated region
        $region61: #{tpu_custom_call.1} parent=55 // pred_check
          %p339 = pneg %p111
        $region62: #{tpu_custom_call.1} parent=55 // pred_check_branch
          %341 = sbr.rel (%p339) target = $region64
        $region63: #{tpu_custom_call.1} parent=55 // pred_region
          %342 = dma.done [#allocation7], 256
        $region64: #{tpu_custom_call.1} parent=55 // pred_fallthru
          _
        // Predicated region
        $region65: #{tpu_custom_call.1} parent=55 // pred_check
          %p343 = pneg %p132
        $region66: #{tpu_custom_call.1} parent=55 // pred_check_branch
          %345 = sbr.rel (%p343) target = $region68
        $region67: #{tpu_custom_call.1} parent=55 // pred_region
          %346 = dma.done [#allocation7], 256
        $region68: #{tpu_custom_call.1} parent=55 // pred_fallthru
          _
        %s347 = sand.u32 %s35, 1
        %s348 = scalar_lea.sflag [#allocation4], %s347
        %s349 = sand.u32 %s35, 1
        %s350 = smul.addr %s349, 8
        %s351 = scalar_lea.vmem [#allocation3], %s350
        %p352 = pneg %p48
        %p353 = pneg %p45
        %p354 = pneg %p69
        %p355 = pneg %p66
        %p356 = pneg %p90
        %p357 = pneg %p87
        %p358 = pneg %p111
        %p359 = pneg %p108
        %p360 = pneg %p132
        %p361 = pneg %p129
        %p362 = pneg %p153
        %p363 = pneg %p150
        %p364 = pneg %p174
        %p365 = pneg %p171
        %p366 = pneg %p195
        %p367 = pneg %p192
        %p368 = pneg %p216
        %p369 = pneg %p213
        %p370 = pneg %p242
        %p371 = pneg %p239
        %s372 = sand.u32 %s229, 1
        %s373 = scalar_lea.sflag [#allocation5], %s372
        %s374 = sand.u32 %s229, 1
        %s375 = smul.addr %s374, 8
        %s376 = scalar_lea.vmem [#allocation9], %s375
        %v378 = vld [vmem:[%s334] sm:$0xff]
        %v379 = vld [vmem:[%s1] sm:$0x1]
        %v380 = vld [vmem:[%s2] sm:$0x1]
        %vm381 = vcmask 261120
        %v382 = vsel %vm381, %v378, 0.0
        %383 = vadd.xlane.f32.xlu0 %v382
        %v384 = vpop.xlane.xlu0 %383
        %v385 = vrcp.pop 32.0
        %v386 = vmul.f32 %v384, %v385
        %v387 = vsub.f32 %v378, %v386
        %v388 = vmul.f32 %v387, %v387
        %v389 = vsel %vm381, %v388, 0.0
        %390 = vadd.xlane.f32.xlu0 %v389
        %v391 = vpop.xlane.xlu0 %390
        %v392 = vmul.f32 %v391, %v385
        %v393 = vadd.f32 %v392, 1e-05
        %v394 = vrsqrt.pop %v393
        %v395 = vmul.f32 %v387, %v394
        %v397 = vlaneseq
        %v398 = vshrl.u32 %v397, 7
        %v399 = vsub.s32 0, %v398
        %v400 = vrot.slane %v379, %v399
        %v402 = vmul.f32 %v395, %v400
        %v404 = vlaneseq
        %v405 = vshrl.u32 %v404, 7
        %v406 = vsub.s32 0, %v405
        %v407 = vrot.slane %v380, %v406
        %v409 = vadd.f32 %v402, %v407
        %v410 = vpack.c.bf16 %v409, %v409
        %v411 = vld [vmem:[#allocation6] sm:$0xf]
        %v412 = vld [vmem:[#allocation6 + $0x4] sm:$0xf]
        %v413 = vld [vmem:[#allocation6 + $0x8] sm:$0xf]
        %v414 = vld [vmem:[#allocation6 + $0xc] sm:$0xf]
        %v415 = vld [vmem:[%s5] sm:$0x1]
        %v417 = vlaneseq
        %v418 = vshrl.u32 %v417, 7
        %v419 = vsub.s32 0, %v418
        %v420 = vrot.slane %v415, %v419
        %v426 = vunpack.c.l.b16 %v411
        %v427 = vunpack.c.l.b16 %v412
        %v428 = vunpack.c.l.b16 %v413
        %v429 = vunpack.c.l.b16 %v414
        %v430 = vpack.c.b16 %v427, %v426
        %v431 = vpack.c.b16 %v429, %v428
        %v435 = vsel %vm381, %v410, 0
        %437 = vmatprep.subr.bf16.mxu0 0
        %438 = vmatpush1.bf16.msra.mxu0 %v430
        %439 = vmatprep.subr.bf16.mxu0 0
        %440 = vmatpush1.bf16.msra.mxu0 %v431
        %441 = vmatprep.subr.bf16.mxu0 0
        %442 = vmatpush1.bf16.msra.mxu0 0
        %443 = vmatprep.subr.bf16.mxu0 0
        %444 = vmatpush1.bf16.msra.mxu0 0
        %445 = vmatprep.subr.bf16.mxu0 0
        %446 = vmatpush1.bf16.msra.mxu0 0
        %447 = vmatprep.subr.bf16.mxu0 0
        %448 = vmatpush1.bf16.msra.mxu0 0
        %449 = vmatprep.subr.bf16.mxu0 0
        %450 = vmatpush1.bf16.msra.mxu0 0
        %451 = vmatprep.subr.bf16.mxu0 0
        %452 = vmatpush1.bf16.msra.mxu0 0
        %453 = vmatprep.subr.bf16.mxu0 0
        %454 = vmatpush1.bf16.msra.mxu0 0
        %455 = vmatprep.subr.bf16.mxu0 0
        %456 = vmatpush1.bf16.msra.mxu0 0
        %457 = vmatprep.subr.bf16.mxu0 0
        %458 = vmatpush1.bf16.msra.mxu0 0
        %459 = vmatprep.subr.bf16.mxu0 0
        %460 = vmatpush1.bf16.msra.mxu0 0
        %461 = vmatprep.subr.bf16.mxu0 0
        %462 = vmatpush1.bf16.msra.mxu0 0
        %463 = vmatprep.subr.bf16.mxu0 0
        %464 = vmatpush1.bf16.msra.mxu0 0
        %465 = vmatprep.subr.bf16.mxu0 0
        %466 = vmatpush1.bf16.msra.mxu0 0
        %467 = vmatprep.subr.bf16.mxu0 0
        %468 = vmatpush1.bf16.msra.mxu0 0
        %469 = vmatprep.mubr.bf16.mxu0 0
        %470 = vmatmul.mubr.bf16.gmra.mrb[0].mxu0 %v435
        %v471 = vpop.f32.mrb[0].mxu0
        %v472 = vadd.f32 %v420, %v471
        %v473 = vpop.f32.mrb[0].mxu0
        %v474 = vpop.f32.mrb[0].mxu0
        %v475 = vpop.f32.mrb[0].mxu0
        %476 = vdwg.mxu0
        %v477 = vpack.c.bf16 %v378, %v378
        %v478 = vld [vmem:[#allocation8] sm:$0xf]
        %v479 = vld [vmem:[#allocation8 + $0x4] sm:$0xf]
        %v480 = vld [vmem:[#allocation8 + $0x8] sm:$0xf]
        %v481 = vld [vmem:[#allocation8 + $0xc] sm:$0xf]
        %v482 = vld [vmem:[%s6] sm:$0x1]
        %v484 = vlaneseq
        %v485 = vshrl.u32 %v484, 7
        %v486 = vsub.s32 0, %v485
        %v487 = vrot.slane %v482, %v486
        %v493 = vunpack.c.l.b16 %v478
        %v494 = vunpack.c.l.b16 %v479
        %v495 = vunpack.c.l.b16 %v480
        %v496 = vunpack.c.l.b16 %v481
        %v497 = vpack.c.b16 %v494, %v493
        %v498 = vpack.c.b16 %v496, %v495
        %v502 = vsel %vm381, %v477, 0
        %504 = vmatprep.subr.bf16.mxu0 0
        %505 = vmatpush1.bf16.msra.mxu0 %v497
        %506 = vmatprep.subr.bf16.mxu0 0
        %507 = vmatpush1.bf16.msra.mxu0 %v498
        %508 = vmatprep.subr.bf16.mxu0 0
        %509 = vmatpush1.bf16.msra.mxu0 0
        %510 = vmatprep.subr.bf16.mxu0 0
        %511 = vmatpush1.bf16.msra.mxu0 0
        %512 = vmatprep.subr.bf16.mxu0 0
        %513 = vmatpush1.bf16.msra.mxu0 0
        %514 = vmatprep.subr.bf16.mxu0 0
        %515 = vmatpush1.bf16.msra.mxu0 0
        %516 = vmatprep.subr.bf16.mxu0 0
        %517 = vmatpush1.bf16.msra.mxu0 0
        %518 = vmatprep.subr.bf16.mxu0 0
        %519 = vmatpush1.bf16.msra.mxu0 0
        %520 = vmatprep.subr.bf16.mxu0 0
        %521 = vmatpush1.bf16.msra.mxu0 0
        %522 = vmatprep.subr.bf16.mxu0 0
        %523 = vmatpush1.bf16.msra.mxu0 0
        %524 = vmatprep.subr.bf16.mxu0 0
        %525 = vmatpush1.bf16.msra.mxu0 0
        %526 = vmatprep.subr.bf16.mxu0 0
        %527 = vmatpush1.bf16.msra.mxu0 0
        %528 = vmatprep.subr.bf16.mxu0 0
        %529 = vmatpush1.bf16.msra.mxu0 0
        %530 = vmatprep.subr.bf16.mxu0 0
        %531 = vmatpush1.bf16.msra.mxu0 0
        %532 = vmatprep.subr.bf16.mxu0 0
        %533 = vmatpush1.bf16.msra.mxu0 0
        %534 = vmatprep.subr.bf16.mxu0 0
        %535 = vmatpush1.bf16.msra.mxu0 0
        %536 = vmatprep.mubr.bf16.mxu0 0
        %537 = vmatmul.mubr.bf16.gmra.mrb[0].mxu0 %v502
        %v538 = vpop.f32.mrb[0].mxu0
        %v539 = vadd.f32 %v487, %v538
        %v540 = vpop.f32.mrb[0].mxu0
        %v541 = vpop.f32.mrb[0].mxu0
        %v542 = vpop.f32.mrb[0].mxu0
        %543 = vdwg.mxu0
        %v544 = vpack.c.bf16 %v472, %v472
        %v545 = vpack.c.bf16 %v539, %v539
        %vm546 = vcmask 64512
        %v548 = vsel %vm546, %v544, 0
        %v551 = vsel %vm546, %v545, 0
        %553 = vmatprep.subr.bf16.mxu0 0
        %554 = vmatpush1.bf16.xpose.msra.mxu0 %v551
        %555 = vmatprep.subr.bf16.mxu0 0
        %556 = vmatpush1.bf16.xpose.msra.mxu0 0
        %557 = vmatprep.subr.bf16.mxu0 0
        %558 = vmatpush1.bf16.xpose.msra.mxu0 0
        %559 = vmatprep.subr.bf16.mxu0 0
        %560 = vmatpush1.bf16.xpose.msra.mxu0 0
        %561 = vmatprep.subr.bf16.mxu0 0
        %562 = vmatpush1.bf16.xpose.msra.mxu0 0
        %563 = vmatprep.subr.bf16.mxu0 0
        %564 = vmatpush1.bf16.xpose.msra.mxu0 0
        %565 = vmatprep.subr.bf16.mxu0 0
        %566 = vmatpush1.bf16.xpose.msra.mxu0 0
        %567 = vmatprep.subr.bf16.mxu0 0
        %568 = vmatpush1.bf16.xpose.msra.mxu0 0
        %569 = vmatprep.subr.bf16.mxu0 0
        %570 = vmatpush1.bf16.xpose.msra.mxu0 0
        %571 = vmatprep.subr.bf16.mxu0 0
        %572 = vmatpush1.bf16.xpose.msra.mxu0 0
        %573 = vmatprep.subr.bf16.mxu0 0
        %574 = vmatpush1.bf16.xpose.msra.mxu0 0
        %575 = vmatprep.subr.bf16.mxu0 0
        %576 = vmatpush1.bf16.xpose.msra.mxu0 0
        %577 = vmatprep.subr.bf16.mxu0 0
        %578 = vmatpush1.bf16.xpose.msra.mxu0 0
        %579 = vmatprep.subr.bf16.mxu0 0
        %580 = vmatpush1.bf16.xpose.msra.mxu0 0
        %581 = vmatprep.subr.bf16.mxu0 0
        %582 = vmatpush1.bf16.xpose.msra.mxu0 0
        %583 = vmatprep.subr.bf16.mxu0 0
        %584 = vmatpush1.bf16.xpose.msra.mxu0 0
        %585 = vmatprep.mubr.bf16.mxu0 0
        %586 = vmatmul.mubr.bf16.gmra.mrb[0].mxu0 %v548
        %v587 = vpop.f32.mrb[0].mxu0
        %v588 = vadd.f32 0.0, %v587
        %v589 = vpop.f32.mrb[0].mxu0
        %v590 = vpop.f32.mrb[0].mxu0
        %v591 = vpop.f32.mrb[0].mxu0
        %592 = vdwg.mxu0
        %v593 = vmul.f32 %v588, 0.35355338
        %v594 = vsel %vm546, %v593, -inf
        %595 = vmax.xlane.f32.xlu0 %v594
        %v596 = vpop.xlane.xlu0 %595
        %v597 = vsub.f32 %v593, %v596
        %v598 = vmul.f32 %v597, 1.442695
        %v599 = vpow.pop %v598
        %v600 = vsel %vm546, %v599, 0.0
        %601 = vadd.xlane.f32.xlu0 %v600
        %v602 = vpop.xlane.xlu0 %601
        %v603 = vrcp.pop %v602
        %v604 = vmul.f32 %v599, %v603
        %v605 = vpack.c.bf16 %v604, %v604
        %607 = vrot.lane.b32.xlu0 %v545, 96
        %v608 = vpop.permute.xlu0 %607
        %v610 = vsel %vm546, %v605, 0
        %vm612 = vcmask 1043456
        %v614 = vsel %vm612, %v608, 0
        %616 = vmatprep.subr.bf16.mxu0 0
        %617 = vmatpush1.bf16.msra.mxu0 %v614
        %618 = vmatprep.subr.bf16.mxu0 0
        %619 = vmatpush1.bf16.msra.mxu0 0
        %620 = vmatprep.subr.bf16.mxu0 0
        %621 = vmatpush1.bf16.msra.mxu0 0
        %622 = vmatprep.subr.bf16.mxu0 0
        %623 = vmatpush1.bf16.msra.mxu0 0
        %624 = vmatprep.subr.bf16.mxu0 0
        %625 = vmatpush1.bf16.msra.mxu0 0
        %626 = vmatprep.subr.bf16.mxu0 0
        %627 = vmatpush1.bf16.msra.mxu0 0
        %628 = vmatprep.subr.bf16.mxu0 0
        %629 = vmatpush1.bf16.msra.mxu0 0
        %630 = vmatprep.subr.bf16.mxu0 0
        %631 = vmatpush1.bf16.msra.mxu0 0
        %632 = vmatprep.subr.bf16.mxu0 0
        %633 = vmatpush1.bf16.msra.mxu0 0
        %634 = vmatprep.subr.bf16.mxu0 0
        %635 = vmatpush1.bf16.msra.mxu0 0
        %636 = vmatprep.subr.bf16.mxu0 0
        %637 = vmatpush1.bf16.msra.mxu0 0
        %638 = vmatprep.subr.bf16.mxu0 0
        %639 = vmatpush1.bf16.msra.mxu0 0
        %640 = vmatprep.subr.bf16.mxu0 0
        %641 = vmatpush1.bf16.msra.mxu0 0
        %642 = vmatprep.subr.bf16.mxu0 0
        %643 = vmatpush1.bf16.msra.mxu0 0
        %644 = vmatprep.subr.bf16.mxu0 0
        %645 = vmatpush1.bf16.msra.mxu0 0
        %646 = vmatprep.subr.bf16.mxu0 0
        %647 = vmatpush1.bf16.msra.mxu0 0
        %648 = vmatprep.mubr.bf16.mxu0 0
        %649 = vmatmul.mubr.bf16.gmra.mrb[0].mxu0 %v610
        %v650 = vpop.f32.mrb[0].mxu0
        %v651 = vadd.f32 0.0, %v650
        %v652 = vpop.f32.mrb[0].mxu0
        %v653 = vpop.f32.mrb[0].mxu0
        %v654 = vpop.f32.mrb[0].mxu0
        %655 = vdwg.mxu0
        %656 = vst.msk [vmem:[#allocation2] sm:$0xff] %vm546, %v651
        %658 = vrot.lane.b32.xlu0 %v544, 120
        %v659 = vpop.permute.xlu0 %658
        %660 = vrot.lane.b32.xlu0 %v545, 120
        %v661 = vpop.permute.xlu0 %660
        %v663 = vsel %vm546, %v659, 0
        %v666 = vsel %vm546, %v661, 0
        %668 = vmatprep.subr.bf16.mxu0 0
        %669 = vmatpush1.bf16.xpose.msra.mxu0 %v666
        %670 = vmatprep.subr.bf16.mxu0 0
        %671 = vmatpush1.bf16.xpose.msra.mxu0 0
        %672 = vmatprep.subr.bf16.mxu0 0
        %673 = vmatpush1.bf16.xpose.msra.mxu0 0
        %674 = vmatprep.subr.bf16.mxu0 0
        %675 = vmatpush1.bf16.xpose.msra.mxu0 0
        %676 = vmatprep.subr.bf16.mxu0 0
        %677 = vmatpush1.bf16.xpose.msra.mxu0 0
        %678 = vmatprep.subr.bf16.mxu0 0
        %679 = vmatpush1.bf16.xpose.msra.mxu0 0
        %680 = vmatprep.subr.bf16.mxu0 0
        %681 = vmatpush1.bf16.xpose.msra.mxu0 0
        %682 = vmatprep.subr.bf16.mxu0 0
        %683 = vmatpush1.bf16.xpose.msra.mxu0 0
        %684 = vmatprep.subr.bf16.mxu0 0
        %685 = vmatpush1.bf16.xpose.msra.mxu0 0
        %686 = vmatprep.subr.bf16.mxu0 0
        %687 = vmatpush1.bf16.xpose.msra.mxu0 0
        %688 = vmatprep.subr.bf16.mxu0 0
        %689 = vmatpush1.bf16.xpose.msra.mxu0 0
        %690 = vmatprep.subr.bf16.mxu0 0
        %691 = vmatpush1.bf16.xpose.msra.mxu0 0
        %692 = vmatprep.subr.bf16.mxu0 0
        %693 = vmatpush1.bf16.xpose.msra.mxu0 0
        %694 = vmatprep.subr.bf16.mxu0 0
        %695 = vmatpush1.bf16.xpose.msra.mxu0 0
        %696 = vmatprep.subr.bf16.mxu0 0
        %697 = vmatpush1.bf16.xpose.msra.mxu0 0
        %698 = vmatprep.subr.bf16.mxu0 0
        %699 = vmatpush1.bf16.xpose.msra.mxu0 0
        %700 = vmatprep.mubr.bf16.mxu0 0
        %701 = vmatmul.mubr.bf16.gmra.mrb[0].mxu0 %v663
        %v702 = vpop.f32.mrb[0].mxu0
        %v703 = vadd.f32 0.0, %v702
        %v704 = vpop.f32.mrb[0].mxu0
        %v705 = vpop.f32.mrb[0].mxu0
        %v706 = vpop.f32.mrb[0].mxu0
        %707 = vdwg.mxu0
        %v708 = vmul.f32 %v703, 0.35355338
        %v709 = vsel %vm546, %v708, -inf
        %710 = vmax.xlane.f32.xlu0 %v709
        %v711 = vpop.xlane.xlu0 %710
        %v712 = vsub.f32 %v708, %v711
        %v713 = vmul.f32 %v712, 1.442695
        %v714 = vpow.pop %v713
        %v715 = vsel %vm546, %v714, 0.0
        %716 = vadd.xlane.f32.xlu0 %v715
        %v717 = vpop.xlane.xlu0 %716
        %v718 = vrcp.pop %v717
        %v719 = vmul.f32 %v714, %v718
        %v720 = vpack.c.bf16 %v719, %v719
        %721 = vrot.lane.b32.xlu0 %v545, 88
        %v722 = vpop.permute.xlu0 %721
        %v724 = vsel %vm546, %v720, 0
        %v727 = vsel %vm612, %v722, 0
        %729 = vmatprep.subr.bf16.mxu0 0
        %730 = vmatpush1.bf16.msra.mxu0 %v727
        %731 = vmatprep.subr.bf16.mxu0 0
        %732 = vmatpush1.bf16.msra.mxu0 0
        %733 = vmatprep.subr.bf16.mxu0 0
        %734 = vmatpush1.bf16.msra.mxu0 0
        %735 = vmatprep.subr.bf16.mxu0 0
        %736 = vmatpush1.bf16.msra.mxu0 0
        %737 = vmatprep.subr.bf16.mxu0 0
        %738 = vmatpush1.bf16.msra.mxu0 0
        %739 = vmatprep.subr.bf16.mxu0 0
        %740 = vmatpush1.bf16.msra.mxu0 0
        %741 = vmatprep.subr.bf16.mxu0 0
        %742 = vmatpush1.bf16.msra.mxu0 0
        %743 = vmatprep.subr.bf16.mxu0 0
        %744 = vmatpush1.bf16.msra.mxu0 0
        %745 = vmatprep.subr.bf16.mxu0 0
        %746 = vmatpush1.bf16.msra.mxu0 0
        %747 = vmatprep.subr.bf16.mxu0 0
        %748 = vmatpush1.bf16.msra.mxu0 0
        %749 = vmatprep.subr.bf16.mxu0 0
        %750 = vmatpush1.bf16.msra.mxu0 0
        %751 = vmatprep.subr.bf16.mxu0 0
        %752 = vmatpush1.bf16.msra.mxu0 0
        %753 = vmatprep.subr.bf16.mxu0 0
        %754 = vmatpush1.bf16.msra.mxu0 0
        %755 = vmatprep.subr.bf16.mxu0 0
        %756 = vmatpush1.bf16.msra.mxu0 0
        %757 = vmatprep.subr.bf16.mxu0 0
        %758 = vmatpush1.bf16.msra.mxu0 0
        %759 = vmatprep.subr.bf16.mxu0 0
        %760 = vmatpush1.bf16.msra.mxu0 0
        %761 = vmatprep.mubr.bf16.mxu0 0
        %762 = vmatmul.mubr.bf16.gmra.mrb[0].mxu0 %v724
        %v763 = vpop.f32.mrb[0].mxu0
        %v764 = vadd.f32 0.0, %v763
        %v765 = vpop.f32.mrb[0].mxu0
        %v766 = vpop.f32.mrb[0].mxu0
        %v767 = vpop.f32.mrb[0].mxu0
        %768 = vdwg.mxu0
        %770 = vrot.lane.b32.xlu0 %v764, 8
        %v771 = vpop.permute.xlu0 %770
        %vm773 = vcmask 130112
        %774 = vst.msk [vmem:[#allocation2] sm:$0xff] %vm773, %v771
        %775 = vrot.lane.b32.xlu0 %v544, 112
        %v776 = vpop.permute.xlu0 %775
        %777 = vrot.lane.b32.xlu0 %v545, 112
        %v778 = vpop.permute.xlu0 %777
        %v780 = vsel %vm546, %v776, 0
        %v783 = vsel %vm546, %v778, 0
        %785 = vmatprep.subr.bf16.mxu0 0
        %786 = vmatpush1.bf16.xpose.msra.mxu0 %v783
        %787 = vmatprep.subr.bf16.mxu0 0
        %788 = vmatpush1.bf16.xpose.msra.mxu0 0
        %789 = vmatprep.subr.bf16.mxu0 0
        %790 = vmatpush1.bf16.xpose.msra.mxu0 0
        %791 = vmatprep.subr.bf16.mxu0 0
        %792 = vmatpush1.bf16.xpose.msra.mxu0 0
        %793 = vmatprep.subr.bf16.mxu0 0
        %794 = vmatpush1.bf16.xpose.msra.mxu0 0
        %795 = vmatprep.subr.bf16.mxu0 0
        %796 = vmatpush1.bf16.xpose.msra.mxu0 0
        %797 = vmatprep.subr.bf16.mxu0 0
        %798 = vmatpush1.bf16.xpose.msra.mxu0 0
        %799 = vmatprep.subr.bf16.mxu0 0
        %800 = vmatpush1.bf16.xpose.msra.mxu0 0
        %801 = vmatprep.subr.bf16.mxu0 0
        %802 = vmatpush1.bf16.xpose.msra.mxu0 0
        %803 = vmatprep.subr.bf16.mxu0 0
        %804 = vmatpush1.bf16.xpose.msra.mxu0 0
        %805 = vmatprep.subr.bf16.mxu0 0
        %806 = vmatpush1.bf16.xpose.msra.mxu0 0
        %807 = vmatprep.subr.bf16.mxu0 0
        %808 = vmatpush1.bf16.xpose.msra.mxu0 0
        %809 = vmatprep.subr.bf16.mxu0 0
        %810 = vmatpush1.bf16.xpose.msra.mxu0 0
        %811 = vmatprep.subr.bf16.mxu0 0
        %812 = vmatpush1.bf16.xpose.msra.mxu0 0
        %813 = vmatprep.subr.bf16.mxu0 0
        %814 = vmatpush1.bf16.xpose.msra.mxu0 0
        %815 = vmatprep.subr.bf16.mxu0 0
        %816 = vmatpush1.bf16.xpose.msra.mxu0 0
        %817 = vmatprep.mubr.bf16.mxu0 0
        %818 = vmatmul.mubr.bf16.gmra.mrb[0].mxu0 %v780
        %v819 = vpop.f32.mrb[0].mxu0
        %v820 = vadd.f32 0.0, %v819
        %v821 = vpop.f32.mrb[0].mxu0
        %v822 = vpop.f32.mrb[0].mxu0
        %v823 = vpop.f32.mrb[0].mxu0
        %824 = vdwg.mxu0
        %v825 = vmul.f32 %v820, 0.35355338
        %v826 = vsel %vm546, %v825, -inf
        %827 = vmax.xlane.f32.xlu0 %v826
        %v828 = vpop.xlane.xlu0 %827
        %v829 = vsub.f32 %v825, %v828
        %v830 = vmul.f32 %v829, 1.442695
        %v831 = vpow.pop %v830
        %v832 = vsel %vm546, %v831, 0.0
        %833 = vadd.xlane.f32.xlu0 %v832
        %v834 = vpop.xlane.xlu0 %833
        %v835 = vrcp.pop %v834
        %v836 = vmul.f32 %v831, %v835
        %v837 = vpack.c.bf16 %v836, %v836
        %838 = vrot.lane.b32.xlu0 %v545, 80
        %v839 = vpop.permute.xlu0 %838
        %v841 = vsel %vm546, %v837, 0
        %v844 = vsel %vm612, %v839, 0
        %846 = vmatprep.subr.bf16.mxu0 0
        %847 = vmatpush1.bf16.msra.mxu0 %v844
        %848 = vmatprep.subr.bf16.mxu0 0
        %849 = vmatpush1.bf16.msra.mxu0 0
        %850 = vmatprep.subr.bf16.mxu0 0
        %851 = vmatpush1.bf16.msra.mxu0 0
        %852 = vmatprep.subr.bf16.mxu0 0
        %853 = vmatpush1.bf16.msra.mxu0 0
        %854 = vmatprep.subr.bf16.mxu0 0
        %855 = vmatpush1.bf16.msra.mxu0 0
        %856 = vmatprep.subr.bf16.mxu0 0
        %857 = vmatpush1.bf16.msra.mxu0 0
        %858 = vmatprep.subr.bf16.mxu0 0
        %859 = vmatpush1.bf16.msra.mxu0 0
        %860 = vmatprep.subr.bf16.mxu0 0
        %861 = vmatpush1.bf16.msra.mxu0 0
        %862 = vmatprep.subr.bf16.mxu0 0
        %863 = vmatpush1.bf16.msra.mxu0 0
        %864 = vmatprep.subr.bf16.mxu0 0
        %865 = vmatpush1.bf16.msra.mxu0 0
        %866 = vmatprep.subr.bf16.mxu0 0
        %867 = vmatpush1.bf16.msra.mxu0 0
        %868 = vmatprep.subr.bf16.mxu0 0
        %869 = vmatpush1.bf16.msra.mxu0 0
        %870 = vmatprep.subr.bf16.mxu0 0
        %871 = vmatpush1.bf16.msra.mxu0 0
        %872 = vmatprep.subr.bf16.mxu0 0
        %873 = vmatpush1.bf16.msra.mxu0 0
        %874 = vmatprep.subr.bf16.mxu0 0
        %875 = vmatpush1.bf16.msra.mxu0 0
        %876 = vmatprep.subr.bf16.mxu0 0
        %877 = vmatpush1.bf16.msra.mxu0 0
        %878 = vmatprep.mubr.bf16.mxu0 0
        %879 = vmatmul.mubr.bf16.gmra.mrb[0].mxu0 %v841
        %v880 = vpop.f32.mrb[0].mxu0
        %v881 = vadd.f32 0.0, %v880
        %v882 = vpop.f32.mrb[0].mxu0
        %v883 = vpop.f32.mrb[0].mxu0
        %v884 = vpop.f32.mrb[0].mxu0
        %885 = vdwg.mxu0
        %887 = vrot.lane.b32.xlu0 %v881, 16
        %v888 = vpop.permute.xlu0 %887
        %vm890 = vcmask 195712
        %891 = vst.msk [vmem:[#allocation2] sm:$0xff] %vm890, %v888
        %892 = vrot.lane.b32.xlu0 %v544, 104
        %v893 = vpop.permute.xlu0 %892
        %894 = vrot.lane.b32.xlu0 %v545, 104
        %v895 = vpop.permute.xlu0 %894
        %v897 = vsel %vm546, %v893, 0
        %v900 = vsel %vm546, %v895, 0
        %902 = vmatprep.subr.bf16.mxu0 0
        %903 = vmatpush1.bf16.xpose.msra.mxu0 %v900
        %904 = vmatprep.subr.bf16.mxu0 0
        %905 = vmatpush1.bf16.xpose.msra.mxu0 0
        %906 = vmatprep.subr.bf16.mxu0 0
        %907 = vmatpush1.bf16.xpose.msra.mxu0 0
        %908 = vmatprep.subr.bf16.mxu0 0
        %909 = vmatpush1.bf16.xpose.msra.mxu0 0
        %910 = vmatprep.subr.bf16.mxu0 0
        %911 = vmatpush1.bf16.xpose.msra.mxu0 0
        %912 = vmatprep.subr.bf16.mxu0 0
        %913 = vmatpush1.bf16.xpose.msra.mxu0 0
        %914 = vmatprep.subr.bf16.mxu0 0
        %915 = vmatpush1.bf16.xpose.msra.mxu0 0
        %916 = vmatprep.subr.bf16.mxu0 0
        %917 = vmatpush1.bf16.xpose.msra.mxu0 0
        %918 = vmatprep.subr.bf16.mxu0 0
        %919 = vmatpush1.bf16.xpose.msra.mxu0 0
        %920 = vmatprep.subr.bf16.mxu0 0
        %921 = vmatpush1.bf16.xpose.msra.mxu0 0
        %922 = vmatprep.subr.bf16.mxu0 0
        %923 = vmatpush1.bf16.xpose.msra.mxu0 0
        %924 = vmatprep.subr.bf16.mxu0 0
        %925 = vmatpush1.bf16.xpose.msra.mxu0 0
        %926 = vmatprep.subr.bf16.mxu0 0
        %927 = vmatpush1.bf16.xpose.msra.mxu0 0
        %928 = vmatprep.subr.bf16.mxu0 0
        %929 = vmatpush1.bf16.xpose.msra.mxu0 0
        %930 = vmatprep.subr.bf16.mxu0 0
        %931 = vmatpush1.bf16.xpose.msra.mxu0 0
        %932 = vmatprep.subr.bf16.mxu0 0
        %933 = vmatpush1.bf16.xpose.msra.mxu0 0
        %934 = vmatprep.mubr.bf16.mxu0 0
        %935 = vmatmul.mubr.bf16.gmra.mrb[0].mxu0 %v897
        %v936 = vpop.f32.mrb[0].mxu0
        %v937 = vadd.f32 0.0, %v936
        %v938 = vpop.f32.mrb[0].mxu0
        %v939 = vpop.f32.mrb[0].mxu0
        %v940 = vpop.f32.mrb[0].mxu0
        %941 = vdwg.mxu0
        %v942 = vmul.f32 %v937, 0.35355338
        %v943 = vsel %vm546, %v942, -inf
        %944 = vmax.xlane.f32.xlu0 %v943
        %v945 = vpop.xlane.xlu0 %944
        %v946 = vsub.f32 %v942, %v945
        %v947 = vmul.f32 %v946, 1.442695
        %v948 = vpow.pop %v947
        %v949 = vsel %vm546, %v948, 0.0
        %950 = vadd.xlane.f32.xlu0 %v949
        %v951 = vpop.xlane.xlu0 %950
        %v952 = vrcp.pop %v951
        %v953 = vmul.f32 %v948, %v952
        %v954 = vpack.c.bf16 %v953, %v953
        %955 = vrot.lane.b32.xlu0 %v545, 72
        %v956 = vpop.permute.xlu0 %955
        %v958 = vsel %vm546, %v954, 0
        %v961 = vsel %vm612, %v956, 0
        %963 = vmatprep.subr.bf16.mxu0 0
        %964 = vmatpush1.bf16.msra.mxu0 %v961
        %965 = vmatprep.subr.bf16.mxu0 0
        %966 = vmatpush1.bf16.msra.mxu0 0
        %967 = vmatprep.subr.bf16.mxu0 0
        %968 = vmatpush1.bf16.msra.mxu0 0
        %969 = vmatprep.subr.bf16.mxu0 0
        %970 = vmatpush1.bf16.msra.mxu0 0
        %971 = vmatprep.subr.bf16.mxu0 0
        %972 = vmatpush1.bf16.msra.mxu0 0
        %973 = vmatprep.subr.bf16.mxu0 0
        %974 = vmatpush1.bf16.msra.mxu0 0
        %975 = vmatprep.subr.bf16.mxu0 0
        %976 = vmatpush1.bf16.msra.mxu0 0
        %977 = vmatprep.subr.bf16.mxu0 0
        %978 = vmatpush1.bf16.msra.mxu0 0
        %979 = vmatprep.subr.bf16.mxu0 0
        %980 = vmatpush1.bf16.msra.mxu0 0
        %981 = vmatprep.subr.bf16.mxu0 0
        %982 = vmatpush1.bf16.msra.mxu0 0
        %983 = vmatprep.subr.bf16.mxu0 0
        %984 = vmatpush1.bf16.msra.mxu0 0
        %985 = vmatprep.subr.bf16.mxu0 0
        %986 = vmatpush1.bf16.msra.mxu0 0
        %987 = vmatprep.subr.bf16.mxu0 0
        %988 = vmatpush1.bf16.msra.mxu0 0
        %989 = vmatprep.subr.bf16.mxu0 0
        %990 = vmatpush1.bf16.msra.mxu0 0
        %991 = vmatprep.subr.bf16.mxu0 0
        %992 = vmatpush1.bf16.msra.mxu0 0
        %993 = vmatprep.subr.bf16.mxu0 0
        %994 = vmatpush1.bf16.msra.mxu0 0
        %995 = vmatprep.mubr.bf16.mxu0 0
        %996 = vmatmul.mubr.bf16.gmra.mrb[0].mxu0 %v958
        %v997 = vpop.f32.mrb[0].mxu0
        %v998 = vadd.f32 0.0, %v997
        %v999 = vpop.f32.mrb[0].mxu0
        %v1000 = vpop.f32.mrb[0].mxu0
        %v1001 = vpop.f32.mrb[0].mxu0
        %1002 = vdwg.mxu0
        %1004 = vrot.lane.b32.xlu0 %v998, 24
        %v1005 = vpop.permute.xlu0 %1004
        %vm1007 = vcmask 261312
        %1008 = vst.msk [vmem:[#allocation2] sm:$0xff] %vm1007, %v1005
        %v1009 = vld [vmem:[#allocation2] sm:$0xff]
        %v1010 = vpack.c.bf16 %v1009, %v1009
        %v1011 = vld [vmem:[%s7] sm:$0xf]
        %v1012 = vld [vmem:[%s7 + $0x4] sm:$0xf]
        %v1013 = vld [vmem:[%s7 + $0x8] sm:$0xf]
        %v1014 = vld [vmem:[%s7 + $0xc] sm:$0xf]
        %v1019 = vunpack.c.l.b16 %v1011
        %v1020 = vunpack.c.l.b16 %v1012
        %v1021 = vunpack.c.l.b16 %v1013
        %v1022 = vunpack.c.l.b16 %v1014
        %v1023 = vpack.c.b16 %v1020, %v1019
        %v1024 = vpack.c.b16 %v1022, %v1021
        %v1028 = vsel %vm381, %v1010, 0
        %1030 = vmatprep.subr.bf16.mxu0 0
        %1031 = vmatpush1.bf16.msra.mxu0 %v1023
        %1032 = vmatprep.subr.bf16.mxu0 0
        %1033 = vmatpush1.bf16.msra.mxu0 %v1024
        %1034 = vmatprep.subr.bf16.mxu0 0
        %1035 = vmatpush1.bf16.msra.mxu0 0
        %1036 = vmatprep.subr.bf16.mxu0 0
        %1037 = vmatpush1.bf16.msra.mxu0 0
        %1038 = vmatprep.subr.bf16.mxu0 0
        %1039 = vmatpush1.bf16.msra.mxu0 0
        %1040 = vmatprep.subr.bf16.mxu0 0
        %1041 = vmatpush1.bf16.msra.mxu0 0
        %1042 = vmatprep.subr.bf16.mxu0 0
        %1043 = vmatpush1.bf16.msra.mxu0 0
        %1044 = vmatprep.subr.bf16.mxu0 0
        %1045 = vmatpush1.bf16.msra.mxu0 0
        %1046 = vmatprep.subr.bf16.mxu0 0
        %1047 = vmatpush1.bf16.msra.mxu0 0
        %1048 = vmatprep.subr.bf16.mxu0 0
        %1049 = vmatpush1.bf16.msra.mxu0 0
        %1050 = vmatprep.subr.bf16.mxu0 0
        %1051 = vmatpush1.bf16.msra.mxu0 0
        %1052 = vmatprep.subr.bf16.mxu0 0
        %1053 = vmatpush1.bf16.msra.mxu0 0
        %1054 = vmatprep.subr.bf16.mxu0 0
        %1055 = vmatpush1.bf16.msra.mxu0 0
        %1056 = vmatprep.subr.bf16.mxu0 0
        %1057 = vmatpush1.bf16.msra.mxu0 0
        %1058 = vmatprep.subr.bf16.mxu0 0
        %1059 = vmatpush1.bf16.msra.mxu0 0
        %1060 = vmatprep.subr.bf16.mxu0 0
        %1061 = vmatpush1.bf16.msra.mxu0 0
        %1062 = vmatprep.mubr.bf16.mxu0 0
        %1063 = vmatmul.mubr.bf16.gmra.mrb[0].mxu0 %v1028
        %v1064 = vpop.f32.mrb[0].mxu0
        %v1065 = vadd.f32 0.0, %v1064
        %v1066 = vpop.f32.mrb[0].mxu0
        %v1067 = vpop.f32.mrb[0].mxu0
        %v1068 = vpop.f32.mrb[0].mxu0
        %1069 = vdwg.mxu0
        %v1070 = vadd.f32 %v378, %v1065
        %v1071 = vld [vmem:[%s8] sm:$0x1]
        %v1073 = vlaneseq
        %v1074 = vshrl.u32 %v1073, 7
        %v1075 = vsub.s32 0, %v1074
        %v1076 = vrot.slane %v1071, %v1075
        %v1078 = vadd.f32 %v1070, %v1076
        %1079 = vst.msk [vmem:[%s376] sm:$0xff] %vm381, %v1078
        %s1080 = sand.u32 %s229, 1
        %s1081 = scalar_lea.sflag [#allocation5], %s1080
        %s1082 = sand.u32 %s229, 1
        %s1083 = smul.addr %s1082, 8
        %s1084 = scalar_lea.vmem [#allocation9], %s1083
        // Predicated region
        $region69: #{tpu_custom_call.1} parent=55 // pred_check
          %p1085 = pneg %p239
        $region70: #{tpu_custom_call.1} parent=55 // pred_check_branch
          %1087 = sbr.rel (%p1085) target = $region72
        $region71: #{tpu_custom_call.1} parent=55 // pred_region
          %s1089 = ssub.s32 128, 128
          %1090 = vsyncadd %s1081, %s1089
          %s1091 = smul.addr %s27, 128
          %s1092 = scalar_lea.hbm %s9, %s1091
          %s1094 = sshll.u32 %s1084, 4
          %s1095 = int_to_ptr.vmem [resolvable:$true] %s1094
          %1097 = dma.vmem_to_hbm [thread:$0]  %s1095, 128, %s1092, %s1081
        $region72: #{tpu_custom_call.1} parent=55 // pred_fallthru
          _
      $region56: #{tpu_custom_call.1} parent=5 // pred_fallthru
        _
      %p1098 = scmp.le.s32.totalorder 2, %s22
      // Predicated region
      $region73: #{tpu_custom_call.1} parent=5 // pred_check
        %p1099 = pneg %p1098
      $region74: #{tpu_custom_call.1} parent=5 // pred_check_branch
        %1101 = sbr.rel (%p1099) target = $region76
      $region75: #{tpu_custom_call.1} parent=5 // pred_region
        %s1102 = ssub.s32 %s22, 2
        // Predicated region
        $region77: #{tpu_custom_call.1} parent=75 // pred_check
          %p1103 = pneg %p245
        $region78: #{tpu_custom_call.1} parent=75 // pred_check_branch
          %1105 = sbr.rel (%p1103) target = $region80
        $region79: #{tpu_custom_call.1} parent=75 // pred_region
          %s1106 = sand.u32 %s230, 1
          %s1107 = scalar_lea.sflag [#allocation5], %s1106
          %s1108 = sand.u32 %s230, 1
          %s1109 = smul.addr %s1108, 8
          %s1110 = scalar_lea.vmem [#allocation9], %s1109
          %1111 = dma.done %s1107, 128
        $region80: #{tpu_custom_call.1} parent=75 // pred_fallthru
          _
      $region76: #{tpu_custom_call.1} parent=5 // pred_fallthru
        _
    $region6: #{tpu_custom_call.1} parent=1 // loop_footer
      %s26 = sadd.s32 1, %s22
    $region7: #{tpu_custom_call.1} parent=1 // loop_footer_branch
      %21 = sbr.rel target = $region3
    $region8: #{tpu_custom_call.1} parent=1 // loop_exit
      _
    %1112 = vsyncpa [#allocation4], 1
    %s1113 = scalar_lea.sflag [#allocation4], 1
    %1114 = vsyncpa %s1113, 1
    %1115 = vsyncpa [#allocation7], 1
    %1116 = vsyncpa [#allocation5], 1
    %s1117 = scalar_lea.sflag [#allocation5], 1
    %1118 = vsyncpa %s1117, 1

</llo_original>
